<compile_context>
chip_gen: v7x
topology: tpu7x:2x2x1
jax: 0.10.0
libtpu: 0.0.40
codegen_flags: <defaults>
</compile_context>

<pallas_src>
import functools

import jax
import jax.numpy as jnp
from jax import lax
from jax.experimental import pallas as pl
from jax.experimental.pallas import tpu as pltpu


def _tokenizer_kernel(p_ref, w1_ref, b1_ref, wg_ref, b2_ref, out_ref, *,
                      F, M2, W2, C_mid4, C_out):
    """Fused conv1 -> ReLU -> conv2 -> ReLU -> spatial-mean for F frames.

    p_ref : (F*M2, 4*9*C_in) bf16   parity-grouped conv1 im2col patches
    w1_ref: (4*9*C_in, 4*C_mid) bf16 block-diagonal conv1 weight
    b1_ref: (1, 4*C_mid) f32         conv1 bias tiled over the 4 parity planes
    wg_ref: (4, 4*C_mid, C_out) bf16 conv2 weights grouped by row-shift
    b2_ref: (1, C_out) f32
    out_ref:(F, C_out) f32           one token per frame
    """
    # ---------------- conv1: one lane-dense matmul (K = 108, N = 128) ----------
    y1 = jnp.dot(p_ref[...], w1_ref[...], preferred_element_type=jnp.float32)
    y1 = jnp.maximum(y1 + b1_ref[...], 0.0)                  # (F*M2, 4*C_mid) f32

    # Lane block q = 2*pr + pc of y1 row m = i2*W2 + j2 holds the conv1/ReLU
    # output at spatial position (2*i2 + pr, 2*j2 + pc).
    y1b = y1.astype(jnp.bfloat16).reshape(F, M2, C_mid4)

    # kw==0 taps read the conv2 left zero-padding at destination column 0:
    # zero the SOURCE entries whose column is W2-1 (they would wrap around).
    # Computed once, tiny, shared by both masked shift groups.
    keep = (lax.broadcasted_iota(jnp.int32, (M2, C_mid4), 0) % W2) != (W2 - 1)
    y1m = y1b * keep.astype(jnp.bfloat16)                    # broadcast over F

    def shift_rows(t, s):
        # Per-frame shift down by s flattened rows, zero-filling the top
        # (conv2 top / left zero padding).
        z = jnp.zeros((F, s, C_mid4), jnp.bfloat16)
        return jnp.concatenate([z, t[:, :M2 - s, :]], axis=1)

    def dot_group(t, g):
        return jnp.dot(t.reshape(F * M2, C_mid4), wg_ref[g],
                       preferred_element_type=jnp.float32)

    # ---------------- conv2: 4 accumulating K=128 matmuls ----------------------
    # group 0: taps (1,1)(1,2)(2,1)(2,2)  -> no shift
    # group 1: taps (1,0)(2,0)            -> shift 1, masked
    # group 2: taps (0,1)(0,2)            -> shift W2
    # group 3: tap  (0,0)                 -> shift W2+1, masked
    acc = dot_group(y1b, 0)
    acc += dot_group(shift_rows(y1m, 1), 1)
    acc += dot_group(shift_rows(y1b, W2), 2)
    acc += dot_group(shift_rows(y1m, W2 + 1), 3)

    y2 = jnp.maximum(acc + b2_ref[...], 0.0)                 # (F*M2, C_out) f32

    # ---------------- spatial mean -> one token per frame -----------------------
    out_ref[...] = jnp.mean(y2.reshape(F, M2, C_out), axis=1)


def _vmem_limit_bytes():
    """~70% of this generation's per-core VMEM, capped at 100 MiB (v5e/v6e: 128 MiB,
    v7x: 64 MiB). Conservative fallback if the query is unavailable."""
    try:
        cap = int(pltpu.get_tpu_info().vmem_capacity_bytes)
    except Exception:
        cap = 64 * 1024 * 1024
    return int(min(cap * 7 // 10, 100 * 1024 * 1024))


def _choose_frames_per_step(N, M2, vmem_limit_bytes):
    """VMEM-derived frames-per-grid-step (multiple of 8)."""
    # ~bytes of VMEM per frame: double-buffered bf16 patch block (lane-padded to
    # 128) + f32/bf16 conv temporaries; ~5 KiB per output row is conservative.
    per_frame = M2 * 5 * 1024
    budget = max(vmem_limit_bytes - 4 * 1024 * 1024, 4 * 1024 * 1024)
    f_vmem = max(8, (budget // per_frame) // 8 * 8)
    n8 = ((N + 7) // 8) * 8
    # keep >= 2 grid steps when there is enough work so v7x can use both cores
    f_split = max(8, (n8 // 2) // 8 * 8) if n8 >= 16 else n8
    return int(min(f_vmem, f_split, n8, 1024))


@functools.partial(jax.jit, static_argnames=("F", "vmem_limit"))
def _forward_impl(video_frames, w1, b1, w2, b2, *, F, vmem_limit):
    B, T, C, H, W = video_frames.shape
    C_mid, C_out = w1.shape[-1], w2.shape[-1]
    H2, W2 = H // 4, W // 4
    M2 = H2 * W2
    K1 = 9 * C
    C_mid4 = 4 * C_mid
    N = B * T
    N_pad = ((N + F - 1) // F) * F

    # ---- glue: pad + strided slices -> parity-grouped, lane-dense bf16 patches --
    # pat[n, i2*W2+j2, q*9C + (kh*3+kw)*C + c] with q = 2*pr+pc is the input pixel
    # feeding conv1 output (2*i2+pr, 2*j2+pc), tap (kh, kw), channel c.
    x = video_frames.reshape(N, C, H, W).transpose(0, 2, 3, 1).astype(jnp.float32)
    xp = jnp.pad(x, ((0, 0), (1, 1), (1, 1), (0, 0)))        # (N, H+2, W+2, C)
    groups = []
    for pr in range(2):
        for pc in range(2):
            taps = [xp[:, 2 * pr + kh: 2 * pr + kh + 4 * H2 - 3: 4,
                          2 * pc + kw: 2 * pc + kw + 4 * W2 - 3: 4, :]
                    for kh in range(3) for kw in range(3)]    # each (N, H2, W2, C)
            groups.append(jnp.concatenate(taps, axis=-1))     # (N, H2, W2, 9C)
    pat = jnp.concatenate(groups, axis=-1)                    # (N, H2, W2, 36C)
    pat = pat.reshape(N, M2, 4 * K1).astype(jnp.bfloat16)
    if N_pad != N:
        pat = jnp.pad(pat, ((0, N_pad - N), (0, 0), (0, 0)))
    pat = pat.reshape(N_pad * M2, 4 * K1)

    # Block-diagonal conv1 weight: the 4 parity planes come out side-by-side in
    # lanes of a single (.., 4*C_mid) matmul result.
    w1r = w1.reshape(K1, C_mid).astype(jnp.float32)
    w1_bd = jnp.kron(jnp.eye(4, dtype=jnp.float32), w1r).astype(jnp.bfloat16)
    b1t = jnp.tile(b1.astype(jnp.float32), 4).reshape(1, C_mid4)

    # conv2 weights regrouped by row-shift group: rows [plane*C_mid:(plane+1)*C_mid]
    # of group g carry w2[kh, kw] for the (plane -> tap) pairs of that group.
    wg = jnp.zeros((4, C_mid4, C_out), jnp.float32)
    placements = [
        (0, 0, 1, 1), (0, 1, 1, 2), (0, 2, 2, 1), (0, 3, 2, 2),  # shift 0
        (1, 1, 1, 0), (1, 3, 2, 0),                              # shift 1   (masked)
        (2, 2, 0, 1), (2, 3, 0, 2),                              # shift W2
        (3, 3, 0, 0),                                            # shift W2+1 (masked)
    ]
    for g, p, kh, kw in placements:
        wg = wg.at[g, p * C_mid:(p + 1) * C_mid, :].set(w2[kh, kw].astype(jnp.float32))
    wg = wg.astype(jnp.bfloat16)
    b2t = b2.astype(jnp.float32).reshape(1, C_out)

    kern = functools.partial(_tokenizer_kernel, F=F, M2=M2, W2=W2,
                             C_mid4=C_mid4, C_out=C_out)

    tokens = pl.pallas_call(
        kern,
        out_shape=jax.ShapeDtypeStruct((N_pad, C_out), jnp.float32),
        grid_spec=pltpu.PrefetchScalarGridSpec(
            num_scalar_prefetch=0,
            grid=(N_pad // F,),
            in_specs=[
                pl.BlockSpec((F * M2, 4 * K1), lambda n: (n, 0)),      # patches (bf16)
                pl.BlockSpec((4 * K1, C_mid4), lambda n: (0, 0)),      # w1 block-diag
                pl.BlockSpec((1, C_mid4), lambda n: (0, 0)),           # b1 tiled
                pl.BlockSpec((4, C_mid4, C_out), lambda n: (0, 0, 0)),  # w2 groups
                pl.BlockSpec((1, C_out), lambda n: (0, 0)),            # b2
            ],
            out_specs=pl.BlockSpec((F, C_out), lambda n: (n, 0)),
        ),
        compiler_params=pltpu.CompilerParams(
            dimension_semantics=("parallel",),      # lets v7x shard frames over 2 TCs
            vmem_limit_bytes=vmem_limit,
        ),
    )(pat, w1_bd, b1t, wg, b2t)

    return tokens[:N].reshape(B, T, C_out)


def video_tokenizer_forward(video_frames, params, *, frames_per_step=None):
    """video_frames: (B, T, C, H, W) float32 -- same convention as the PyTorch module."""
    B, T, C, H, W = video_frames.shape
    assert H % 4 == 0 and W % 4 == 0, "kernel assumes H, W divisible by 4"
    w1, b1, w2, b2 = params
    M2 = (H // 4) * (W // 4)
    N = B * T
    vmem_limit = _vmem_limit_bytes()
    F = frames_per_step if frames_per_step is not None else \
        _choose_frames_per_step(N, M2, vmem_limit)
    assert F % 8 == 0
    return _forward_impl(video_frames, w1, b1, w2, b2, F=F, vmem_limit=vmem_limit)


def _ref_forward(video_frames, params):
    """Pure-JAX reference (mirrors the PyTorch module) for a correctness check."""
    B, T, C, H, W = video_frames.shape
    w1, b1, w2, b2 = params
    x = video_frames.reshape(B * T, C, H, W).transpose(0, 2, 3, 1)     # NHWC
    dn = ('NHWC', 'HWIO', 'NHWC')
    y = lax.conv_general_dilated(
        x, w1, (2, 2), ((1, 1), (1, 1)),
        dimension_numbers=lax.conv_dimension_numbers(x.shape, w1.shape, dn),
        precision=lax.Precision.HIGHEST)
    y = jnp.maximum(y + b1.reshape(1, 1, 1, -1), 0.0)
    y = lax.conv_general_dilated(
        y, w2, (2, 2), ((1, 1), (1, 1)),
        dimension_numbers=lax.conv_dimension_numbers(y.shape, w2.shape, dn),
        precision=lax.Precision.HIGHEST)
    y = jnp.maximum(y + b2.reshape(1, 1, 1, -1), 0.0)
    return y.mean(axis=(1, 2)).reshape(B, T, -1)


if __name__ == "__main__":
    # Small shapes consistent with the module: in_channels=3, conv1 out=32,
    # token_dim (= Config.VIDEO_TOKEN_DIM) = 64.
    B, T, C, H, W = 2, 4, 3, 16, 16
    C_MID = 32
    TOKEN_DIM = 64

    key = jax.random.PRNGKey(0)
    k_x, k_w1, k_b1, k_w2, k_b2 = jax.random.split(key, 5)

    video = jax.random.normal(k_x, (B, T, C, H, W), jnp.float32)
    # Synthetic parameters in HWIO layout (matches the NHWC convs above).
    w1 = 0.1 * jax.random.normal(k_w1, (3, 3, C, C_MID), jnp.float32)
    b1 = 0.1 * jax.random.normal(k_b1, (C_MID,), jnp.float32)
    w2 = 0.1 * jax.random.normal(k_w2, (3, 3, C_MID, TOKEN_DIM), jnp.float32)
    b2 = 0.1 * jax.random.normal(k_b2, (TOKEN_DIM,), jnp.float32)
    params = (w1, b1, w2, b2)

    out = jax.block_until_ready(video_tokenizer_forward(video, params))

    assert out.shape == (B, T, TOKEN_DIM), out.shape
    ref = _ref_forward(video, params)
    max_err = float(jnp.max(jnp.abs(out - ref)))
    # bf16 MXU operands vs an f32 HIGHEST-precision reference.
    assert max_err < 2e-2, f"mismatch vs reference, max_err={max_err}"

    print("KERNEL_OK")
</pallas_src>

<mosaic_0001>
module attributes {stable_mosaic.version = 11 : i64} {
  func.func @_tokenizer_kernel(%arg0: i32, %arg1: memref<128x108xbf16, #tpu.memory_space<vmem>>, %arg2: memref<108x128xbf16, #tpu.memory_space<vmem>>, %arg3: memref<1x128xf32, #tpu.memory_space<vmem>>, %arg4: memref<4x128x64xbf16, #tpu.memory_space<vmem>>, %arg5: memref<1x64xf32, #tpu.memory_space<vmem>>, %arg6: memref<8x64xf32, #tpu.memory_space<vmem>>) attributes {dimension_semantics = [#tpu.dimension_semantics<parallel>], iteration_bounds = array<i64: 1>, scalar_prefetch = 0 : i64, scratch_operands = 0 : i64, tpu.core_type = #tpu.core_type<tc>, window_params = [{transform_indices = @transform_0, window_bounds = array<i64: 128, 108>}, {pipeline_mode = #tpu.pipeline_mode<synchronous>, transform_indices = @transform_1, window_bounds = array<i64: 108, 128>}, {pipeline_mode = #tpu.pipeline_mode<synchronous>, transform_indices = @transform_2, window_bounds = array<i64: 1, 128>}, {pipeline_mode = #tpu.pipeline_mode<synchronous>, transform_indices = @transform_3, window_bounds = array<i64: 4, 128, 64>}, {pipeline_mode = #tpu.pipeline_mode<synchronous>, transform_indices = @transform_4, window_bounds = array<i64: 1, 64>}, {transform_indices = @transform_5, window_bounds = array<i64: 8, 64>}]} {
    %c0 = arith.constant 0 : index
    %c0_0 = arith.constant 0 : index
    %0 = vector.load %arg1[%c0, %c0_0] : memref<128x108xbf16, #tpu.memory_space<vmem>>, vector<128x108xbf16>
    %c0_1 = arith.constant 0 : index
    %c0_2 = arith.constant 0 : index
    %1 = vector.load %arg2[%c0_1, %c0_2] : memref<108x128xbf16, #tpu.memory_space<vmem>>, vector<108x128xbf16>
    %cst = arith.constant dense<0.000000e+00> : vector<128x128xf32>
    %2 = tpu.matmul %0, %1, %cst {dimension_numbers = #tpu.dot_dimension_numbers<[1], [0], [0], [1], [0, 0, 1, 1], [], []>} : vector<128x108xbf16>, vector<108x128xbf16>, vector<128x128xf32> -> vector<128x128xf32>
    %c0_3 = arith.constant 0 : index
    %c0_4 = arith.constant 0 : index
    %3 = vector.load %arg3[%c0_3, %c0_4] : memref<1x128xf32, #tpu.memory_space<vmem>>, vector<1x128xf32>
    %4 = vector.broadcast %3 : vector<1x128xf32> to vector<128x128xf32>
    %5 = arith.addf %2, %4 : vector<128x128xf32>
    %cst_5 = arith.constant 0.000000e+00 : f32
    %6 = vector.broadcast %cst_5 : f32 to vector<128x128xf32>
    %7 = arith.maximumf %5, %6 : vector<128x128xf32>
    %8 = arith.truncf %7 : vector<128x128xf32> to vector<128x128xbf16>
    %9 = vector.shape_cast %8 : vector<128x128xbf16> to vector<8x16x128xbf16>
    %10 = tpu.iota {dimensions = array<i32: 0>} : vector<16x128xi32>
    %c4_i32 = arith.constant 4 : i32
    %c0_i32 = arith.constant 0 : i32
    %11 = arith.cmpi eq, %c4_i32, %c0_i32 : i32
    %c1_i32 = arith.constant 1 : i32
    %12 = arith.select %11, %c1_i32, %c4_i32 : i32
    %13 = vector.broadcast %12 : i32 to vector<16x128xi32>
    %14 = arith.remsi %10, %13 : vector<16x128xi32>
    %c0_i32_6 = arith.constant 0 : i32
    %15 = vector.broadcast %c0_i32_6 : i32 to vector<16x128xi32>
    %16 = arith.cmpi ne, %14, %15 : vector<16x128xi32>
    %c0_i32_7 = arith.constant 0 : i32
    %17 = vector.broadcast %c0_i32_7 : i32 to vector<16x128xi32>
    %18 = arith.cmpi slt, %14, %17 : vector<16x128xi32>
    %c0_i32_8 = arith.constant 0 : i32
    %19 = arith.cmpi slt, %12, %c0_i32_8 : i32
    %20 = vector.broadcast %19 : i1 to vector<16x128xi1>
    %21 = vector.broadcast %20 : vector<16x128xi1> to vector<16x128xi1>
    %22 = arith.xori %18, %21 : vector<16x128xi1>
    %23 = arith.andi %22, %16 : vector<16x128xi1>
    %24 = vector.broadcast %12 : i32 to vector<16x128xi32>
    %25 = arith.addi %14, %24 : vector<16x128xi32>
    %26 = arith.select %23, %25, %14 : vector<16x128xi1>, vector<16x128xi32>
    %c3_i32 = arith.constant 3 : i32
    %27 = vector.broadcast %c3_i32 : i32 to vector<16x128xi32>
    %28 = arith.cmpi ne, %26, %27 : vector<16x128xi32>
    %29 = arith.extui %28 : vector<16x128xi1> to vector<16x128xi32>
    %30 = arith.sitofp %29 : vector<16x128xi32> to vector<16x128xf32>
    %31 = arith.truncf %30 : vector<16x128xf32> to vector<16x128xbf16>
    %32 = vector.shape_cast %31 : vector<16x128xbf16> to vector<1x16x128xbf16>
    %33 = vector.broadcast %32 : vector<1x16x128xbf16> to vector<8x16x128xbf16>
    %34 = arith.mulf %9, %33 : vector<8x16x128xbf16>
    %35 = vector.shape_cast %9 : vector<8x16x128xbf16> to vector<128x128xbf16>
    %c0_9 = arith.constant 0 : index
    %c0_10 = arith.constant 0 : index
    %c0_11 = arith.constant 0 : index
    %36 = vector.load %arg4[%c0_9, %c0_10, %c0_11] : memref<4x128x64xbf16, #tpu.memory_space<vmem>>, vector<1x128x64xbf16>
    %37 = vector.shape_cast %36 : vector<1x128x64xbf16> to vector<128x64xbf16>
    %cst_12 = arith.constant dense<0.000000e+00> : vector<128x64xf32>
    %38 = tpu.matmul %35, %37, %cst_12 {dimension_numbers = #tpu.dot_dimension_numbers<[1], [0], [0], [1], [0, 0, 1, 1], [], []>} : vector<128x128xbf16>, vector<128x64xbf16>, vector<128x64xf32> -> vector<128x64xf32>
    %cst_13 = arith.constant 0.000000e+00 : bf16
    %39 = vector.broadcast %cst_13 : bf16 to vector<8x1x128xbf16>
    %40 = vector.extract_strided_slice %34 {offsets = [0, 0, 0], sizes = [8, 15, 128], strides = [1, 1, 1]} : vector<8x16x128xbf16> to vector<8x15x128xbf16>
    %41 = tpu.concatenate %39, %40 in 1 : vector<8x1x128xbf16>, vector<8x15x128xbf16> -> vector<8x16x128xbf16>
    %42 = vector.shape_cast %41 : vector<8x16x128xbf16> to vector<128x128xbf16>
    %c1 = arith.constant 1 : index
    %c0_14 = arith.constant 0 : index
    %c0_15 = arith.constant 0 : index
    %43 = vector.load %arg4[%c1, %c0_14, %c0_15] : memref<4x128x64xbf16, #tpu.memory_space<vmem>>, vector<1x128x64xbf16>
    %44 = vector.shape_cast %43 : vector<1x128x64xbf16> to vector<128x64xbf16>
    %cst_16 = arith.constant dense<0.000000e+00> : vector<128x64xf32>
    %45 = tpu.matmul %42, %44, %cst_16 {dimension_numbers = #tpu.dot_dimension_numbers<[1], [0], [0], [1], [0, 0, 1, 1], [], []>} : vector<128x128xbf16>, vector<128x64xbf16>, vector<128x64xf32> -> vector<128x64xf32>
    %46 = arith.addf %38, %45 : vector<128x64xf32>
    %cst_17 = arith.constant 0.000000e+00 : bf16
    %47 = vector.broadcast %cst_17 : bf16 to vector<8x4x128xbf16>
    %48 = vector.extract_strided_slice %9 {offsets = [0, 0, 0], sizes = [8, 12, 128], strides = [1, 1, 1]} : vector<8x16x128xbf16> to vector<8x12x128xbf16>
    %49 = tpu.concatenate %47, %48 in 1 : vector<8x4x128xbf16>, vector<8x12x128xbf16> -> vector<8x16x128xbf16>
    %50 = vector.shape_cast %49 : vector<8x16x128xbf16> to vector<128x128xbf16>
    %c2 = arith.constant 2 : index
    %c0_18 = arith.constant 0 : index
    %c0_19 = arith.constant 0 : index
    %51 = vector.load %arg4[%c2, %c0_18, %c0_19] : memref<4x128x64xbf16, #tpu.memory_space<vmem>>, vector<1x128x64xbf16>
    %52 = vector.shape_cast %51 : vector<1x128x64xbf16> to vector<128x64xbf16>
    %cst_20 = arith.constant dense<0.000000e+00> : vector<128x64xf32>
    %53 = tpu.matmul %50, %52, %cst_20 {dimension_numbers = #tpu.dot_dimension_numbers<[1], [0], [0], [1], [0, 0, 1, 1], [], []>} : vector<128x128xbf16>, vector<128x64xbf16>, vector<128x64xf32> -> vector<128x64xf32>
    %54 = arith.addf %46, %53 : vector<128x64xf32>
    %cst_21 = arith.constant 0.000000e+00 : bf16
    %55 = vector.broadcast %cst_21 : bf16 to vector<8x5x128xbf16>
    %56 = vector.extract_strided_slice %34 {offsets = [0, 0, 0], sizes = [8, 11, 128], strides = [1, 1, 1]} : vector<8x16x128xbf16> to vector<8x11x128xbf16>
    %57 = tpu.concatenate %55, %56 in 1 : vector<8x5x128xbf16>, vector<8x11x128xbf16> -> vector<8x16x128xbf16>
    %58 = vector.shape_cast %57 : vector<8x16x128xbf16> to vector<128x128xbf16>
    %c3 = arith.constant 3 : index
    %c0_22 = arith.constant 0 : index
    %c0_23 = arith.constant 0 : index
    %59 = vector.load %arg4[%c3, %c0_22, %c0_23] : memref<4x128x64xbf16, #tpu.memory_space<vmem>>, vector<1x128x64xbf16>
    %60 = vector.shape_cast %59 : vector<1x128x64xbf16> to vector<128x64xbf16>
    %cst_24 = arith.constant dense<0.000000e+00> : vector<128x64xf32>
    %61 = tpu.matmul %58, %60, %cst_24 {dimension_numbers = #tpu.dot_dimension_numbers<[1], [0], [0], [1], [0, 0, 1, 1], [], []>} : vector<128x128xbf16>, vector<128x64xbf16>, vector<128x64xf32> -> vector<128x64xf32>
    %62 = arith.addf %54, %61 : vector<128x64xf32>
    %c0_25 = arith.constant 0 : index
    %c0_26 = arith.constant 0 : index
    %63 = vector.load %arg5[%c0_25, %c0_26] : memref<1x64xf32, #tpu.memory_space<vmem>>, vector<1x64xf32>
    %64 = vector.broadcast %63 : vector<1x64xf32> to vector<128x64xf32>
    %65 = arith.addf %62, %64 : vector<128x64xf32>
    %cst_27 = arith.constant 0.000000e+00 : f32
    %66 = vector.broadcast %cst_27 : f32 to vector<128x64xf32>
    %67 = arith.maximumf %65, %66 : vector<128x64xf32>
    %68 = vector.shape_cast %67 : vector<128x64xf32> to vector<8x16x64xf32>
    %cst_28 = arith.constant dense<0.000000e+00> : vector<8x64xf32>
    %69 = vector.multi_reduction <add>, %68, %cst_28 [1] : vector<8x16x64xf32> to vector<8x64xf32>
    %cst_29 = arith.constant 1.600000e+01 : f32
    %70 = vector.broadcast %cst_29 : f32 to vector<8x64xf32>
    %71 = arith.divf %69, %70 : vector<8x64xf32>
    %c0_30 = arith.constant 0 : index
    %c0_31 = arith.constant 0 : index
    %72 = vector.load %arg6[%c0_30, %c0_31] : memref<8x64xf32, #tpu.memory_space<vmem>>, vector<8x64xf32>
    tpu.vector_store %arg6[%c0_30, %c0_31], %71 {strides = array<i32>} : memref<8x64xf32, #tpu.memory_space<vmem>>, vector<8x64xf32>,
    return
  }
  func.func @transform_0(%arg0: i32) -> (i32, i32) {
    %c0_i32 = arith.constant 0 : i32
    %c0_i32_0 = arith.constant 0 : i32
    return %arg0, %c0_i32 : i32, i32
  }
  func.func @transform_1(%arg0: i32) -> (i32, i32) {
    %c0_i32 = arith.constant 0 : i32
    %c0_i32_0 = arith.constant 0 : i32
    %c0_i32_1 = arith.constant 0 : i32
    return %c0_i32, %c0_i32_0 : i32, i32
  }
  func.func @transform_2(%arg0: i32) -> (i32, i32) {
    %c0_i32 = arith.constant 0 : i32
    %c0_i32_0 = arith.constant 0 : i32
    %c0_i32_1 = arith.constant 0 : i32
    return %c0_i32, %c0_i32_0 : i32, i32
  }
  func.func @transform_3(%arg0: i32) -> (i32, i32, i32) {
    %c0_i32 = arith.constant 0 : i32
    %c0_i32_0 = arith.constant 0 : i32
    %c0_i32_1 = arith.constant 0 : i32
    %c0_i32_2 = arith.constant 0 : i32
    return %c0_i32, %c0_i32_0, %c0_i32_1 : i32, i32, i32
  }
  func.func @transform_4(%arg0: i32) -> (i32, i32) {
    %c0_i32 = arith.constant 0 : i32
    %c0_i32_0 = arith.constant 0 : i32
    %c0_i32_1 = arith.constant 0 : i32
    return %c0_i32, %c0_i32_0 : i32, i32
  }
  func.func @transform_5(%arg0: i32) -> (i32, i32) {
    %c0_i32 = arith.constant 0 : i32
    %c0_i32_0 = arith.constant 0 : i32
    return %arg0, %c0_i32 : i32, i32
  }
}

</mosaic_0001>

<llo_original>
// kernel: mul.4
$region0: #{mul.4}
  %s0 = inlined_call_operand.vmem [shape: f32[3,3,3,32], index: 0, kind: input, shape index: {}]
  %s1 = inlined_call_operand.vmem [shape: f32[27,32], index: 1, kind: output, shape index: {}]
  $region1: #{mul.4} parent=0
    #allocation0 [shape = 'u8[36864]{0}', space=vmem, size = 0x9000, scoped, tag = 'scoped mem for input reshape']
    %s3 = sshllo.u32 0, 4
    %s4 = smul.addr 4, 8
    %s5 = scalar_lea.vmem %s0, %s4
    %v6 = vld [vmem:[%s5] sm:%s3]
    %s7 = scalar_lea.vmem [#allocation0], 64
    %8 = vst [vmem:[%s7] sm:%s3] %v6
    %s9 = smul.addr 4, 7
    %s10 = scalar_lea.vmem %s0, %s9
    %v11 = vld [vmem:[%s10] sm:%s3]
    %s12 = scalar_lea.vmem [#allocation0], 56
    %13 = vst [vmem:[%s12] sm:%s3] %v11
    %s14 = smul.addr 4, 6
    %s15 = scalar_lea.vmem %s0, %s14
    %v16 = vld [vmem:[%s15] sm:%s3]
    %s17 = scalar_lea.vmem [#allocation0], 48
    %18 = vst [vmem:[%s17] sm:%s3] %v16
    %s19 = smul.addr 4, 5
    %s20 = scalar_lea.vmem %s0, %s19
    %v21 = vld [vmem:[%s20] sm:%s3]
    %s22 = scalar_lea.vmem [#allocation0], 40
    %23 = vst [vmem:[%s22] sm:%s3] %v21
    %s24 = smul.addr 4, 4
    %s25 = scalar_lea.vmem %s0, %s24
    %v26 = vld [vmem:[%s25] sm:%s3]
    %s27 = scalar_lea.vmem [#allocation0], 32
    %28 = vst [vmem:[%s27] sm:%s3] %v26
    %s29 = smul.addr 4, 3
    %s30 = scalar_lea.vmem %s0, %s29
    %v31 = vld [vmem:[%s30] sm:%s3]
    %s32 = scalar_lea.vmem [#allocation0], 24
    %33 = vst [vmem:[%s32] sm:%s3] %v31
    %s34 = smul.addr 4, 2
    %s35 = scalar_lea.vmem %s0, %s34
    %v36 = vld [vmem:[%s35] sm:%s3]
    %s37 = scalar_lea.vmem [#allocation0], 16
    %38 = vst [vmem:[%s37] sm:%s3] %v36
    %s39 = scalar_lea.vmem %s0, 4
    %v40 = vld [vmem:[%s39] sm:%s3]
    %s41 = scalar_lea.vmem [#allocation0], 8
    %42 = vst [vmem:[%s41] sm:%s3] %v40
    %v43 = vld [vmem:[%s0] sm:%s3]
    %44 = vst [vmem:[#allocation0] sm:%s3] %v43
    %v45 = vld [vmem:[#allocation0] sm:$0x7]
    %vm46 = vcmask 261120
    %47 = vst.msk [vmem:[%s1] sm:$0x7] %vm46, %v45
    %s48 = scalar_lea.vmem [#allocation0], 8
    %v49 = vld [vmem:[%s48] sm:$0x7]
    %vm50 = vcmask 261120
    %s51 = scalar_lea.vmem %s1, 3
    %52 = vst.msk [vmem:[%s51] sm:$0x7] %vm50, %v49
    %s53 = scalar_lea.vmem [#allocation0], 16
    %v54 = vld [vmem:[%s53] sm:$0x7]
    %vm55 = vcmask 261120
    %s56 = scalar_lea.vmem %s1, 6
    %57 = vst.msk [vmem:[%s56] sm:$0x7] %vm55, %v54
    %s58 = scalar_lea.vmem [#allocation0], 24
    %v59 = vld [vmem:[%s58] sm:$0x7]
    %vm60 = vcmask 261120
    %s61 = scalar_lea.vmem %s1, 9
    %62 = vst.msk [vmem:[%s61] sm:$0x7] %vm60, %v59
    %s63 = scalar_lea.vmem [#allocation0], 32
    %v64 = vld [vmem:[%s63] sm:$0x7]
    %vm65 = vcmask 261120
    %s66 = scalar_lea.vmem %s1, 12
    %67 = vst.msk [vmem:[%s66] sm:$0x7] %vm65, %v64
    %s68 = scalar_lea.vmem [#allocation0], 40
    %v69 = vld [vmem:[%s68] sm:$0x7]
    %vm70 = vcmask 261120
    %s71 = scalar_lea.vmem %s1, 15
    %72 = vst.msk [vmem:[%s71] sm:$0x7] %vm70, %v69
    %s73 = scalar_lea.vmem [#allocation0], 48
    %v74 = vld [vmem:[%s73] sm:$0x7]
    %vm75 = vcmask 261120
    %s76 = scalar_lea.vmem %s1, 18
    %77 = vst.msk [vmem:[%s76] sm:$0x7] %vm75, %v74
    %s78 = scalar_lea.vmem [#allocation0], 56
    %v79 = vld [vmem:[%s78] sm:$0x7]
    %vm80 = vcmask 261120
    %s81 = scalar_lea.vmem %s1, 21
    %82 = vst.msk [vmem:[%s81] sm:$0x7] %vm80, %v79
    %s83 = scalar_lea.vmem [#allocation0], 64
    %v84 = vld [vmem:[%s83] sm:$0x7]
    %vm85 = vcmask 261120
    %s86 = scalar_lea.vmem %s1, 24
    %87 = vst.msk [vmem:[%s86] sm:$0x7] %vm85, %v84

// kernel: tile.8
$region0: #{tile.8}
  #allocation0 [shape = 's32[1]{0}', space=sflag, size = 0x4, scoped, tag = 'scoped memory for tile.8']
  %s0 = inlined_call_operand.vmem [shape: f32[32], index: 0, kind: input, shape index: {}]
  %s1 = inlined_call_operand.vmem [shape: f32[4,32], index: 1, kind: output, shape index: {}]
  // Predicated region
  $region2: #{tile.8} parent=0 // pred_check
    _
  $region3: #{tile.8} parent=0 // pred_check_branch
    %3 = sbr.rel (0) target = $region5
  $region4: #{tile.8} parent=0 // pred_region
    _
  $region5: #{tile.8} parent=0 // pred_fallthru
    _
  %v4 = vld [vmem:[%s0] ss:$0 sm:$0xff]
  %5 = vst [vmem:[%s1] sm:$0xf] %v4

// kernel: tile.9
$region0: #{tile.9}
  %s0 = inlined_call_operand.vmem [shape: f32[4,32], index: 0, kind: input, shape index: {}]
  %s1 = inlined_call_operand.vmem [shape: f32[1,128], index: 1, kind: output, shape index: {}]
  $region1: #{tile.9} parent=0
    #allocation0 [shape = 'u8[4096]{0}', space=vmem, size = 0x1000, scoped, tag = 'scoped mem for output reshape']
    #allocation1 [shape = 'u8[4096]{0}', space=vmem, size = 0x1000, scoped, tag = 'scoped mem for input reshape']
    %s3 = sshllo.u32 0, 4
    %v4 = vld [vmem:[%s0] sm:%s3]
    %5 = vst [vmem:[#allocation1] sm:%s3] %v4
    %v6 = vld [vmem:[#allocation1] sm:$0x1]
    %vm7 = vcmask 261120
    %8 = vst.msk [vmem:[#allocation0] sm:$0x1] %vm7, %v6
    %s9 = scalar_lea.vmem [#allocation1], 3
    %v10 = vld [vmem:[%s9] sm:$0x1]
    %11 = vrot.lane.b32.xlu0 %v10, 96
    %v12 = vpop.permute.xlu0 %11
    %vm13 = vcmask 1048320
    %14 = vst.msk [vmem:[#allocation0] sm:$0x1] %vm13, %v12
    %s15 = scalar_lea.vmem [#allocation1], 2
    %v16 = vld [vmem:[%s15] sm:$0x1]
    %17 = vrot.lane.b32.xlu0 %v16, 64
    %v18 = vpop.permute.xlu0 %17
    %vm19 = vcmask 785920
    %20 = vst.msk [vmem:[#allocation0] sm:$0x1] %vm19, %v18
    %s21 = scalar_lea.vmem [#allocation1], 1
    %v22 = vld [vmem:[%s21] sm:$0x1]
    %23 = vrot.lane.b32.xlu0 %v22, 32
    %v24 = vpop.permute.xlu0 %23
    %vm25 = vcmask 523520
    %26 = vst.msk [vmem:[#allocation0] sm:$0x1] %vm25, %v24
    %s28 = sshllo.u32 0, 1
    %v30 = vld [vmem:[#allocation0] sm:%s28]
    %s31 = sshllo.u32 0, 1
    %32 = vst [vmem:[%s1] sm:%s31] %v30

// kernel: _forward_impl.1
$region0: #{_forward_impl.1}
  #allocation0 [shape = 'u32[]', space=smem, size = 0x4, offset = 0x4, fixed_abs, tag = 'smem constant byte address 0x4 - core index']
  #allocation1 [shape = 'u32[144,128]{1,0:T(1,128)}', space=vmem, size = 0x12000, scoped, tag = 'internal scratch']
  %s0 = inlined_call_operand.vmem [shape: bf16[128,108], index: 0, kind: input, shape index: {}]
  %s1 = inlined_call_operand.vmem [shape: bf16[108,128], index: 1, kind: input, shape index: {}]
  %s2 = inlined_call_operand.vmem [shape: f32[1,128], index: 2, kind: input, shape index: {}]
  %s3 = inlined_call_operand.vmem [shape: bf16[4,128,64], index: 3, kind: input, shape index: {}]
  %s4 = inlined_call_operand.vmem [shape: f32[1,64], index: 4, kind: input, shape index: {}]
  %s5 = inlined_call_operand.hbm [shape: f32[8,64], index: 5, kind: output, shape index: {}]
  %s6 = sld [smem:[#allocation0]]
  $region30: #{_forward_impl.1} parent=0
    _
  %s8 = ssub.s32 1, %s6
  %s9 = scalar_select 0, %s8, %s6
  $region1: #{_forward_impl.1} parent=0
    #allocation2 [shape = 'u8[4096]{0}', space=vmem, size = 0x1000, scoped, tag = 'output window, operand 0, single buffered']
    #allocation3 [shape = 's32[1]{0}', space=sflag, size = 0x4, scoped, tag = 'scoped memory for _forward_impl.1']
    %10 = vsyncpa [#allocation3], 0
    // Predicated region
    $region2: #{_forward_impl.1} parent=1 // pred_check
      _
    $region3: #{_forward_impl.1} parent=1 // pred_check_branch
      %12 = sbr.rel (0) target = $region5
    $region4: #{_forward_impl.1} parent=1 // pred_region
      _
    $region5: #{_forward_impl.1} parent=1 // pred_fallthru
      _
    // Predicated region
    $region6: #{_forward_impl.1} parent=1 // pred_check
      _
    $region7: #{_forward_impl.1} parent=1 // pred_check_branch
      %14 = sbr.rel (0) target = $region9
    $region8: #{_forward_impl.1} parent=1 // pred_region
      _
    $region9: #{_forward_impl.1} parent=1 // pred_fallthru
      _
    // Predicated region
    $region10: #{_forward_impl.1} parent=1 // pred_check
      _
    $region11: #{_forward_impl.1} parent=1 // pred_check_branch
      %16 = sbr.rel (0) target = $region13
    $region12: #{_forward_impl.1} parent=1 // pred_region
      _
    $region13: #{_forward_impl.1} parent=1 // pred_fallthru
      _
    // Predicated region
    $region14: #{_forward_impl.1} parent=1 // pred_check
      _
    $region15: #{_forward_impl.1} parent=1 // pred_check_branch
      %18 = sbr.rel (0) target = $region17
    $region16: #{_forward_impl.1} parent=1 // pred_region
      _
    $region17: #{_forward_impl.1} parent=1 // pred_fallthru
      _
    // Predicated region
    $region18: #{_forward_impl.1} parent=1 // pred_check
      _
    $region19: #{_forward_impl.1} parent=1 // pred_check_branch
      %20 = sbr.rel (0) target = $region21
    $region20: #{_forward_impl.1} parent=1 // pred_region
      _
    $region21: #{_forward_impl.1} parent=1 // pred_fallthru
      _
    %v22 = vld [vmem:[%s0] sm:$0xf]
    %v23 = vld [vmem:[%s0 + $0x4] sm:$0xf]
    %v24 = vld [vmem:[%s0 + $0x8] sm:$0xf]
    %v25 = vld [vmem:[%s0 + $0xc] sm:$0xf]
    %v26 = vld [vmem:[%s0 + $0x10] sm:$0xf]
    %v27 = vld [vmem:[%s0 + $0x14] sm:$0xf]
    %v28 = vld [vmem:[%s0 + $0x18] sm:$0xf]
    %v29 = vld [vmem:[%s0 + $0x1c] sm:$0xf]
    %v30 = vld [vmem:[%s0 + $0x20] sm:$0xf]
    %v31 = vld [vmem:[%s0 + $0x24] sm:$0xf]
    %v32 = vld [vmem:[%s0 + $0x28] sm:$0xf]
    %v33 = vld [vmem:[%s0 + $0x2c] sm:$0xf]
    %v34 = vld [vmem:[%s0 + $0x30] sm:$0xf]
    %v35 = vld [vmem:[%s0 + $0x34] sm:$0xf]
    %v36 = vld [vmem:[%s0 + $0x38] sm:$0xf]
    %v37 = vld [vmem:[%s0 + $0x3c] sm:$0xf]
    %v38 = vld [vmem:[%s1] sm:$0xf]
    %v39 = vld [vmem:[%s1 + $0x4] sm:$0xf]
    %v40 = vld [vmem:[%s1 + $0x8] sm:$0xf]
    %v41 = vld [vmem:[%s1 + $0xc] sm:$0xf]
    %v42 = vld [vmem:[%s1 + $0x10] sm:$0xf]
    %v43 = vld [vmem:[%s1 + $0x14] sm:$0xf]
    %v44 = vld [vmem:[%s1 + $0x18] sm:$0xf]
    %v45 = vld [vmem:[%s1 + $0x1c] sm:$0xf]
    %v46 = vld [vmem:[%s1 + $0x20] sm:$0xf]
    %v47 = vld [vmem:[%s1 + $0x24] sm:$0xf]
    %v48 = vld [vmem:[%s1 + $0x28] sm:$0xf]
    %v49 = vld [vmem:[%s1 + $0x2c] sm:$0xf]
    %v50 = vld [vmem:[%s1 + $0x30] sm:$0xf]
    %v51 = vld [vmem:[%s1 + $0x34] sm:$0x3]
    %v52 = vld [vmem:[%s2] sm:$0x1]
    %v54 = vlaneseq
    %v55 = vshrl.u32 %v54, 7
    %v56 = vsub.s32 0, %v55
    %v57 = vrot.slane %v52, %v56
    %v75 = vunpack.c.l.b16 %v22
    %v76 = vunpack.c.l.b16 %v23
    %v77 = vunpack.c.l.b16 %v24
    %v78 = vunpack.c.l.b16 %v25
    %v79 = vunpack.c.l.b16 %v26
    %v80 = vunpack.c.l.b16 %v27
    %v81 = vunpack.c.l.b16 %v28
    %v82 = vunpack.c.l.b16 %v29
    %v83 = vunpack.c.l.b16 %v30
    %v84 = vunpack.c.l.b16 %v31
    %v85 = vunpack.c.l.b16 %v32
    %v86 = vunpack.c.l.b16 %v33
    %v87 = vunpack.c.l.b16 %v34
    %v88 = vunpack.c.l.b16 %v35
    %v89 = vunpack.c.l.b16 %v36
    %v90 = vunpack.c.l.b16 %v37
    %v91 = vpack.c.b16 %v76, %v75
    %v92 = vpack.c.b16 %v78, %v77
    %v93 = vpack.c.b16 %v80, %v79
    %v94 = vpack.c.b16 %v82, %v81
    %v95 = vpack.c.b16 %v84, %v83
    %v96 = vpack.c.b16 %v86, %v85
    %v97 = vpack.c.b16 %v88, %v87
    %v98 = vpack.c.b16 %v90, %v89
    %v113 = vunpack.c.l.b16 %v38
    %v114 = vunpack.c.l.b16 %v39
    %v115 = vunpack.c.l.b16 %v40
    %v116 = vunpack.c.l.b16 %v41
    %v117 = vunpack.c.l.b16 %v42
    %v118 = vunpack.c.l.b16 %v43
    %v119 = vunpack.c.l.b16 %v44
    %v120 = vunpack.c.l.b16 %v45
    %v121 = vunpack.c.l.b16 %v46
    %v122 = vunpack.c.l.b16 %v47
    %v123 = vunpack.c.l.b16 %v48
    %v124 = vunpack.c.l.b16 %v49
    %v125 = vunpack.c.l.b16 %v50
    %v126 = vunpack.c.l.b16 %v51
    %v127 = vpack.c.b16 %v114, %v113
    %v128 = vpack.c.b16 %v116, %v115
    %v129 = vpack.c.b16 %v118, %v117
    %v130 = vpack.c.b16 %v120, %v119
    %v131 = vpack.c.b16 %v122, %v121
    %v132 = vpack.c.b16 %v124, %v123
    %v133 = vpack.c.b16 %v126, %v125
    %vm140 = vcmask 883712
    %v142 = vsel %vm140, %v91, 0
    %v145 = vsel %vm140, %v92, 0
    %v148 = vsel %vm140, %v93, 0
    %v151 = vsel %vm140, %v94, 0
    %v154 = vsel %vm140, %v95, 0
    %v157 = vsel %vm140, %v96, 0
    %v160 = vsel %vm140, %v97, 0
    %v163 = vsel %vm140, %v98, 0
    %vm165 = vcmask 1045504
    %v167 = vsel %vm165, %v133, 0
    %169 = vmatprep.subr.bf16.mxu0 0
    %170 = vmatpush1.bf16.msra.mxu0 %v127
    %171 = vmatprep.subr.bf16.mxu0 0
    %172 = vmatpush1.bf16.msra.mxu0 %v128
    %173 = vmatprep.subr.bf16.mxu0 0
    %174 = vmatpush1.bf16.msra.mxu0 %v129
    %175 = vmatprep.subr.bf16.mxu0 0
    %176 = vmatpush1.bf16.msra.mxu0 %v130
    %177 = vmatprep.subr.bf16.mxu0 0
    %178 = vmatpush1.bf16.msra.mxu0 %v131
    %179 = vmatprep.subr.bf16.mxu0 0
    %180 = vmatpush1.bf16.msra.mxu0 %v132
    %181 = vmatprep.subr.bf16.mxu0 0
    %182 = vmatpush1.bf16.msra.mxu0 %v167
    %183 = vmatprep.subr.bf16.mxu0 0
    %184 = vmatpush1.bf16.msra.mxu0 0
    %185 = vmatprep.subr.bf16.mxu0 0
    %186 = vmatpush1.bf16.msra.mxu0 0
    %187 = vmatprep.subr.bf16.mxu0 0
    %188 = vmatpush1.bf16.msra.mxu0 0
    %189 = vmatprep.subr.bf16.mxu0 0
    %190 = vmatpush1.bf16.msra.mxu0 0
    %191 = vmatprep.subr.bf16.mxu0 0
    %192 = vmatpush1.bf16.msra.mxu0 0
    %193 = vmatprep.subr.bf16.mxu0 0
    %194 = vmatpush1.bf16.msra.mxu0 0
    %195 = vmatprep.subr.bf16.mxu0 0
    %196 = vmatpush1.bf16.msra.mxu0 0
    %197 = vmatprep.subr.bf16.mxu0 0
    %198 = vmatpush1.bf16.msra.mxu0 0
    %199 = vmatprep.subr.bf16.mxu0 0
    %200 = vmatpush1.bf16.msra.mxu0 0
    %201 = vmatprep.mubr.bf16.mxu0 0
    %202 = vmatmul.mubr.bf16.gmra.mrb[0].mxu0 %v142
    %v203 = vpop.f32.mrb[0].mxu0
    %v204 = vadd.f32 %v57, %v203
    %v205 = vpop.f32.mrb[0].mxu0
    %v206 = vpop.f32.mrb[0].mxu0
    %v207 = vadd.f32 %v57, %v206
    %v208 = vpop.f32.mrb[0].mxu0
    %209 = vmatprep.mubr.bf16.mxu0 0
    %210 = vmatmul.mubr.bf16.gmra.mrb[0].mxu0 %v145
    %v211 = vpop.f32.mrb[0].mxu0
    %v212 = vadd.f32 %v57, %v211
    %v213 = vpop.f32.mrb[0].mxu0
    %v214 = vpop.f32.mrb[0].mxu0
    %v215 = vadd.f32 %v57, %v214
    %v216 = vpop.f32.mrb[0].mxu0
    %217 = vmatprep.mubr.bf16.mxu0 0
    %218 = vmatmul.mubr.bf16.gmra.mrb[0].mxu0 %v148
    %v219 = vpop.f32.mrb[0].mxu0
    %v220 = vadd.f32 %v57, %v219
    %v221 = vpop.f32.mrb[0].mxu0
    %v222 = vpop.f32.mrb[0].mxu0
    %v223 = vadd.f32 %v57, %v222
    %v224 = vpop.f32.mrb[0].mxu0
    %225 = vmatprep.mubr.bf16.mxu0 0
    %226 = vmatmul.mubr.bf16.gmra.mrb[0].mxu0 %v151
    %v227 = vpop.f32.mrb[0].mxu0
    %v228 = vadd.f32 %v57, %v227
    %v229 = vpop.f32.mrb[0].mxu0
    %v230 = vpop.f32.mrb[0].mxu0
    %v231 = vadd.f32 %v57, %v230
    %v232 = vpop.f32.mrb[0].mxu0
    %233 = vmatprep.mubr.bf16.mxu0 0
    %234 = vmatmul.mubr.bf16.gmra.mrb[0].mxu0 %v154
    %v235 = vpop.f32.mrb[0].mxu0
    %v236 = vadd.f32 %v57, %v235
    %v237 = vpop.f32.mrb[0].mxu0
    %v238 = vpop.f32.mrb[0].mxu0
    %v239 = vadd.f32 %v57, %v238
    %v240 = vpop.f32.mrb[0].mxu0
    %241 = vmatprep.mubr.bf16.mxu0 0
    %242 = vmatmul.mubr.bf16.gmra.mrb[0].mxu0 %v157
    %v243 = vpop.f32.mrb[0].mxu0
    %v244 = vadd.f32 %v57, %v243
    %v245 = vpop.f32.mrb[0].mxu0
    %v246 = vpop.f32.mrb[0].mxu0
    %v247 = vadd.f32 %v57, %v246
    %v248 = vpop.f32.mrb[0].mxu0
    %249 = vmatprep.mubr.bf16.mxu0 0
    %250 = vmatmul.mubr.bf16.gmra.mrb[0].mxu0 %v160
    %v251 = vpop.f32.mrb[0].mxu0
    %v252 = vadd.f32 %v57, %v251
    %v253 = vpop.f32.mrb[0].mxu0
    %v254 = vpop.f32.mrb[0].mxu0
    %v255 = vadd.f32 %v57, %v254
    %v256 = vpop.f32.mrb[0].mxu0
    %257 = vmatprep.mubr.bf16.mxu0 0
    %258 = vmatmul.mubr.bf16.gmra.mrb[0].mxu0 %v163
    %v259 = vpop.f32.mrb[0].mxu0
    %v260 = vadd.f32 %v57, %v259
    %v261 = vpop.f32.mrb[0].mxu0
    %v262 = vpop.f32.mrb[0].mxu0
    %v263 = vadd.f32 %v57, %v262
    %v264 = vpop.f32.mrb[0].mxu0
    %265 = vdwg.mxu0
    %v266 = vmax.f32 %v204, 0.0
    %v267 = vmax.f32 %v207, 0.0
    %v268 = vmax.f32 %v212, 0.0
    %v269 = vmax.f32 %v215, 0.0
    %v270 = vmax.f32 %v220, 0.0
    %v271 = vmax.f32 %v223, 0.0
    %v272 = vmax.f32 %v228, 0.0
    %v273 = vmax.f32 %v231, 0.0
    %v274 = vmax.f32 %v236, 0.0
    %v275 = vmax.f32 %v239, 0.0
    %v276 = vmax.f32 %v244, 0.0
    %v277 = vmax.f32 %v247, 0.0
    %v278 = vmax.f32 %v252, 0.0
    %v279 = vmax.f32 %v255, 0.0
    %v280 = vmax.f32 %v260, 0.0
    %v281 = vmax.f32 %v263, 0.0
    %v282 = vpack.c.bf16 %v267, %v266
    %v283 = vpack.c.bf16 %v269, %v268
    %v284 = vpack.c.bf16 %v271, %v270
    %v285 = vpack.c.bf16 %v273, %v272
    %v286 = vpack.c.bf16 %v275, %v274
    %v287 = vpack.c.bf16 %v277, %v276
    %v288 = vpack.c.bf16 %v279, %v278
    %v289 = vpack.c.bf16 %v281, %v280
    %v290 = vlaneseq
    %v291 = vshrl.u32 %v290, 7
    %v292 = vadd.s32 %v291, 8
    %vm293 = vcmp.lt.s32.totalorder %v291, 0
    %v294 = vsub.s32 0, %v291
    %v295 = vsel %vm293, %v294, %v291
    %v296 = vshrl.u32 %v295, 2
    %v297 = vand.u32 %v295, 3
    %v298 = vsub.s32 0, %v297
    %v299 = vsel %vm293, %v298, %v297
    %vm300 = vcmp.lt.s32.totalorder %v292, 0
    %v301 = vsub.s32 0, %v292
    %v302 = vsel %vm300, %v301, %v292
    %v303 = vshrl.u32 %v302, 2
    %v304 = vand.u32 %v302, 3
    %v305 = vsub.s32 0, %v304
    %v306 = vsel %vm300, %v305, %v304
    %vm307 = vcmp.ne.s32.totalorder %v299, 0
    %vm308 = vcmp.ne.s32.totalorder %v306, 0
    %vm309 = vcmp.lt.s32.totalorder %v299, 0
    %vm310 = vcmp.lt.s32.totalorder %v306, 0
    %vm311 = vmand %vm309, %vm307
    %vm312 = vmand %vm310, %vm308
    %v313 = vadd.s32 %v299, 4
    %v314 = vadd.s32 %v306, 4
    %v315 = vsel %vm311, %v313, %v299
    %v316 = vsel %vm312, %v314, %v306
    %vm317 = vcmp.ne.s32.totalorder %v315, 3
    %vm318 = vcmp.ne.s32.totalorder %v316, 3
    %v319 = vsel %vm317, 1, 0
    %v320 = vsel %vm318, 1, 0
    %v321 = vcvt.s32.f32 %v319
    %v322 = vcvt.s32.f32 %v320
    %v323 = vpack.c.bf16 %v322, %v321
    %v324 = vmul.bf16 %v282, %v323
    %v325 = vmul.bf16 %v283, %v323
    %v326 = vmul.bf16 %v284, %v323
    %v327 = vmul.bf16 %v285, %v323
    %v328 = vmul.bf16 %v286, %v323
    %v329 = vmul.bf16 %v287, %v323
    %v330 = vmul.bf16 %v288, %v323
    %v331 = vmul.bf16 %v289, %v323
    %v332 = vld [vmem:[%s3] sm:$0xf]
    %v333 = vld [vmem:[%s3 + $0x4] sm:$0xf]
    %v334 = vld [vmem:[%s3 + $0x8] sm:$0xf]
    %v335 = vld [vmem:[%s3 + $0xc] sm:$0xf]
    %v336 = vld [vmem:[%s3 + $0x10] sm:$0xf]
    %v337 = vld [vmem:[%s3 + $0x14] sm:$0xf]
    %v338 = vld [vmem:[%s3 + $0x18] sm:$0xf]
    %v339 = vld [vmem:[%s3 + $0x1c] sm:$0xf]
    %v340 = vld [vmem:[%s3 + $0x20] sm:$0xf]
    %v341 = vld [vmem:[%s3 + $0x24] sm:$0xf]
    %v342 = vld [vmem:[%s3 + $0x28] sm:$0xf]
    %v343 = vld [vmem:[%s3 + $0x2c] sm:$0xf]
    %v344 = vld [vmem:[%s3 + $0x30] sm:$0xf]
    %v345 = vld [vmem:[%s3 + $0x34] sm:$0xf]
    %v346 = vld [vmem:[%s3 + $0x38] sm:$0xf]
    %v347 = vld [vmem:[%s3 + $0x3c] sm:$0xf]
    %v349 = vshrl.u32 %v324, 16
    %v351 = vrot.slane %v349, 7
    %v352 = vshll.u32 %v324, 16
    %v354 = vor.u32 %v351, %v352
    %v356 = vshrl.u32 %v325, 16
    %v358 = vrot.slane %v356, 7
    %v359 = vshll.u32 %v325, 16
    %v361 = vor.u32 %v358, %v359
    %v363 = vshrl.u32 %v326, 16
    %v365 = vrot.slane %v363, 7
    %v366 = vshll.u32 %v326, 16
    %v368 = vor.u32 %v365, %v366
    %v370 = vshrl.u32 %v327, 16
    %v372 = vrot.slane %v370, 7
    %v373 = vshll.u32 %v327, 16
    %v375 = vor.u32 %v372, %v373
    %v377 = vshrl.u32 %v328, 16
    %v379 = vrot.slane %v377, 7
    %v380 = vshll.u32 %v328, 16
    %v382 = vor.u32 %v379, %v380
    %v384 = vshrl.u32 %v329, 16
    %v386 = vrot.slane %v384, 7
    %v387 = vshll.u32 %v329, 16
    %v389 = vor.u32 %v386, %v387
    %v391 = vshrl.u32 %v330, 16
    %v393 = vrot.slane %v391, 7
    %v394 = vshll.u32 %v330, 16
    %v396 = vor.u32 %v393, %v394
    %v398 = vshrl.u32 %v331, 16
    %v400 = vrot.slane %v398, 7
    %v401 = vshll.u32 %v331, 16
    %v403 = vor.u32 %v400, %v401
    %vm412 = vcmask 1040384
    %vm413 = vsmask.f32 256
    %vm414 = vmand %vm412, %vm413
    %v415 = vsel %vm414, 0, %v354
    %v416 = vsel %vm414, 0, %v361
    %v417 = vsel %vm414, 0, %v368
    %v418 = vsel %vm414, 0, %v375
    %v419 = vsel %vm414, 0, %v382
    %v420 = vsel %vm414, 0, %v389
    %v421 = vsel %vm414, 0, %v396
    %v422 = vsel %vm414, 0, %v403
    %s423 = scalar_lea.vmem %s3, 64
    %v424 = vld [vmem:[%s423] sm:$0xf]
    %v425 = vld [vmem:[%s423 + $0x4] sm:$0xf]
    %v426 = vld [vmem:[%s423 + $0x8] sm:$0xf]
    %v427 = vld [vmem:[%s423 + $0xc] sm:$0xf]
    %v428 = vld [vmem:[%s423 + $0x10] sm:$0xf]
    %v429 = vld [vmem:[%s423 + $0x14] sm:$0xf]
    %v430 = vld [vmem:[%s423 + $0x18] sm:$0xf]
    %v431 = vld [vmem:[%s423 + $0x1c] sm:$0xf]
    %v432 = vld [vmem:[%s423 + $0x20] sm:$0xf]
    %v433 = vld [vmem:[%s423 + $0x24] sm:$0xf]
    %v434 = vld [vmem:[%s423 + $0x28] sm:$0xf]
    %v435 = vld [vmem:[%s423 + $0x2c] sm:$0xf]
    %v436 = vld [vmem:[%s423 + $0x30] sm:$0xf]
    %v437 = vld [vmem:[%s423 + $0x34] sm:$0xf]
    %v438 = vld [vmem:[%s423 + $0x38] sm:$0xf]
    %v439 = vld [vmem:[%s423 + $0x3c] sm:$0xf]
    %v456 = vunpack.c.l.b16 %v424
    %v457 = vunpack.c.l.b16 %v425
    %v458 = vunpack.c.l.b16 %v426
    %v459 = vunpack.c.l.b16 %v427
    %v460 = vunpack.c.l.b16 %v428
    %v461 = vunpack.c.l.b16 %v429
    %v462 = vunpack.c.l.b16 %v430
    %v463 = vunpack.c.l.b16 %v431
    %v464 = vunpack.c.l.b16 %v432
    %v465 = vunpack.c.l.b16 %v433
    %v466 = vunpack.c.l.b16 %v434
    %v467 = vunpack.c.l.b16 %v435
    %v468 = vunpack.c.l.b16 %v436
    %v469 = vunpack.c.l.b16 %v437
    %v470 = vunpack.c.l.b16 %v438
    %v471 = vunpack.c.l.b16 %v439
    %v472 = vpack.c.b16 %v457, %v456
    %v473 = vpack.c.b16 %v459, %v458
    %v474 = vpack.c.b16 %v461, %v460
    %v475 = vpack.c.b16 %v463, %v462
    %v476 = vpack.c.b16 %v465, %v464
    %v477 = vpack.c.b16 %v467, %v466
    %v478 = vpack.c.b16 %v469, %v468
    %v479 = vpack.c.b16 %v471, %v470
    %488 = vmatprep.subr.bf16.mxu0 0
    %489 = vmatpush1.bf16.msra.mxu0 %v472
    %490 = vmatprep.subr.bf16.mxu0 0
    %491 = vmatpush1.bf16.msra.mxu0 %v473
    %492 = vmatprep.subr.bf16.mxu0 0
    %493 = vmatpush1.bf16.msra.mxu0 %v474
    %494 = vmatprep.subr.bf16.mxu0 0
    %495 = vmatpush1.bf16.msra.mxu0 %v475
    %496 = vmatprep.subr.bf16.mxu0 0
    %497 = vmatpush1.bf16.msra.mxu0 %v476
    %498 = vmatprep.subr.bf16.mxu0 0
    %499 = vmatpush1.bf16.msra.mxu0 %v477
    %500 = vmatprep.subr.bf16.mxu0 0
    %501 = vmatpush1.bf16.msra.mxu0 %v478
    %502 = vmatprep.subr.bf16.mxu0 0
    %503 = vmatpush1.bf16.msra.mxu0 %v479
    %504 = vmatprep.subr.bf16.mxu0 0
    %505 = vmatpush1.bf16.msra.mxu0 0
    %506 = vmatprep.subr.bf16.mxu0 0
    %507 = vmatpush1.bf16.msra.mxu0 0
    %508 = vmatprep.subr.bf16.mxu0 0
    %509 = vmatpush1.bf16.msra.mxu0 0
    %510 = vmatprep.subr.bf16.mxu0 0
    %511 = vmatpush1.bf16.msra.mxu0 0
    %512 = vmatprep.subr.bf16.mxu0 0
    %513 = vmatpush1.bf16.msra.mxu0 0
    %514 = vmatprep.subr.bf16.mxu0 0
    %515 = vmatpush1.bf16.msra.mxu0 0
    %516 = vmatprep.subr.bf16.mxu0 0
    %517 = vmatpush1.bf16.msra.mxu0 0
    %518 = vmatprep.subr.bf16.mxu0 0
    %519 = vmatpush1.bf16.msra.mxu0 0
    %520 = vmatprep.mubr.bf16.mxu0 0
    %521 = vmatmul.mubr.bf16.gmra.mrb[0].mxu0 %v415
    %v522 = vpop.f32.mrb[0].mxu0
    %v523 = vadd.f32 0.0, %v522
    %v524 = vpop.f32.mrb[0].mxu0
    %v525 = vpop.f32.mrb[0].mxu0
    %v526 = vadd.f32 0.0, %v525
    %v527 = vpop.f32.mrb[0].mxu0
    %528 = vmatprep.mubr.bf16.mxu0 0
    %529 = vmatmul.mubr.bf16.gmra.mrb[0].mxu0 %v416
    %v530 = vpop.f32.mrb[0].mxu0
    %v531 = vadd.f32 0.0, %v530
    %v532 = vpop.f32.mrb[0].mxu0
    %v533 = vpop.f32.mrb[0].mxu0
    %v534 = vadd.f32 0.0, %v533
    %v535 = vpop.f32.mrb[0].mxu0
    %536 = vmatprep.mubr.bf16.mxu0 0
    %537 = vmatmul.mubr.bf16.gmra.mrb[0].mxu0 %v417
    %v538 = vpop.f32.mrb[0].mxu0
    %v539 = vadd.f32 0.0, %v538
    %v540 = vpop.f32.mrb[0].mxu0
    %v541 = vpop.f32.mrb[0].mxu0
    %v542 = vadd.f32 0.0, %v541
    %v543 = vpop.f32.mrb[0].mxu0
    %544 = vmatprep.mubr.bf16.mxu0 0
    %545 = vmatmul.mubr.bf16.gmra.mrb[0].mxu0 %v418
    %v546 = vpop.f32.mrb[0].mxu0
    %v547 = vadd.f32 0.0, %v546
    %v548 = vpop.f32.mrb[0].mxu0
    %v549 = vpop.f32.mrb[0].mxu0
    %v550 = vadd.f32 0.0, %v549
    %v551 = vpop.f32.mrb[0].mxu0
    %552 = vmatprep.mubr.bf16.mxu0 0
    %553 = vmatmul.mubr.bf16.gmra.mrb[0].mxu0 %v419
    %v554 = vpop.f32.mrb[0].mxu0
    %v555 = vadd.f32 0.0, %v554
    %v556 = vpop.f32.mrb[0].mxu0
    %v557 = vpop.f32.mrb[0].mxu0
    %v558 = vadd.f32 0.0, %v557
    %v559 = vpop.f32.mrb[0].mxu0
    %560 = vmatprep.mubr.bf16.mxu0 0
    %561 = vmatmul.mubr.bf16.gmra.mrb[0].mxu0 %v420
    %v562 = vpop.f32.mrb[0].mxu0
    %v563 = vadd.f32 0.0, %v562
    %v564 = vpop.f32.mrb[0].mxu0
    %v565 = vpop.f32.mrb[0].mxu0
    %v566 = vadd.f32 0.0, %v565
    %v567 = vpop.f32.mrb[0].mxu0
    %568 = vmatprep.mubr.bf16.mxu0 0
    %569 = vmatmul.mubr.bf16.gmra.mrb[0].mxu0 %v421
    %v570 = vpop.f32.mrb[0].mxu0
    %v571 = vadd.f32 0.0, %v570
    %v572 = vpop.f32.mrb[0].mxu0
    %v573 = vpop.f32.mrb[0].mxu0
    %v574 = vadd.f32 0.0, %v573
    %v575 = vpop.f32.mrb[0].mxu0
    %576 = vmatprep.mubr.bf16.mxu0 0
    %577 = vmatmul.mubr.bf16.gmra.mrb[0].mxu0 %v422
    %v578 = vpop.f32.mrb[0].mxu0
    %v579 = vadd.f32 0.0, %v578
    %v580 = vpop.f32.mrb[0].mxu0
    %v581 = vpop.f32.mrb[0].mxu0
    %v582 = vadd.f32 0.0, %v581
    %v583 = vpop.f32.mrb[0].mxu0
    %584 = vdwg.mxu0
    %v601 = vunpack.c.l.b16 %v332
    %v602 = vunpack.c.l.b16 %v333
    %v603 = vunpack.c.l.b16 %v334
    %v604 = vunpack.c.l.b16 %v335
    %v605 = vunpack.c.l.b16 %v336
    %v606 = vunpack.c.l.b16 %v337
    %v607 = vunpack.c.l.b16 %v338
    %v608 = vunpack.c.l.b16 %v339
    %v609 = vunpack.c.l.b16 %v340
    %v610 = vunpack.c.l.b16 %v341
    %v611 = vunpack.c.l.b16 %v342
    %v612 = vunpack.c.l.b16 %v343
    %v613 = vunpack.c.l.b16 %v344
    %v614 = vunpack.c.l.b16 %v345
    %v615 = vunpack.c.l.b16 %v346
    %v616 = vunpack.c.l.b16 %v347
    %v617 = vpack.c.b16 %v602, %v601
    %v618 = vpack.c.b16 %v604, %v603
    %v619 = vpack.c.b16 %v606, %v605
    %v620 = vpack.c.b16 %v608, %v607
    %v621 = vpack.c.b16 %v610, %v609
    %v622 = vpack.c.b16 %v612, %v611
    %v623 = vpack.c.b16 %v614, %v613
    %v624 = vpack.c.b16 %v616, %v615
    %633 = vmatprep.subr.bf16.mxu0 0
    %634 = vmatpush1.bf16.msra.mxu0 %v617
    %635 = vmatprep.subr.bf16.mxu0 0
    %636 = vmatpush1.bf16.msra.mxu0 %v618
    %637 = vmatprep.subr.bf16.mxu0 0
    %638 = vmatpush1.bf16.msra.mxu0 %v619
    %639 = vmatprep.subr.bf16.mxu0 0
    %640 = vmatpush1.bf16.msra.mxu0 %v620
    %641 = vmatprep.subr.bf16.mxu0 0
    %642 = vmatpush1.bf16.msra.mxu0 %v621
    %643 = vmatprep.subr.bf16.mxu0 0
    %644 = vmatpush1.bf16.msra.mxu0 %v622
    %645 = vmatprep.subr.bf16.mxu0 0
    %646 = vmatpush1.bf16.msra.mxu0 %v623
    %647 = vmatprep.subr.bf16.mxu0 0
    %648 = vmatpush1.bf16.msra.mxu0 %v624
    %649 = vmatprep.subr.bf16.mxu0 0
    %650 = vmatpush1.bf16.msra.mxu0 0
    %651 = vmatprep.subr.bf16.mxu0 0
    %652 = vmatpush1.bf16.msra.mxu0 0
    %653 = vmatprep.subr.bf16.mxu0 0
    %654 = vmatpush1.bf16.msra.mxu0 0
    %655 = vmatprep.subr.bf16.mxu0 0
    %656 = vmatpush1.bf16.msra.mxu0 0
    %657 = vmatprep.subr.bf16.mxu0 0
    %658 = vmatpush1.bf16.msra.mxu0 0
    %659 = vmatprep.subr.bf16.mxu0 0
    %660 = vmatpush1.bf16.msra.mxu0 0
    %661 = vmatprep.subr.bf16.mxu0 0
    %662 = vmatpush1.bf16.msra.mxu0 0
    %663 = vmatprep.subr.bf16.mxu0 0
    %664 = vmatpush1.bf16.msra.mxu0 0
    %665 = vmatprep.mubr.bf16.mxu0 0
    %666 = vmatmul.mubr.bf16.gmra.mrb[0].mxu0 %v282
    %v667 = vpop.f32.mrb[0].mxu0
    %v668 = vadd.f32 %v523, %v667
    %v669 = vpop.f32.mrb[0].mxu0
    %v670 = vpop.f32.mrb[0].mxu0
    %v671 = vadd.f32 %v526, %v670
    %v672 = vpop.f32.mrb[0].mxu0
    %673 = vmatprep.mubr.bf16.mxu0 0
    %674 = vmatmul.mubr.bf16.gmra.mrb[0].mxu0 %v283
    %v675 = vpop.f32.mrb[0].mxu0
    %v676 = vadd.f32 %v531, %v675
    %v677 = vpop.f32.mrb[0].mxu0
    %v678 = vpop.f32.mrb[0].mxu0
    %v679 = vadd.f32 %v534, %v678
    %v680 = vpop.f32.mrb[0].mxu0
    %681 = vmatprep.mubr.bf16.mxu0 0
    %682 = vmatmul.mubr.bf16.gmra.mrb[0].mxu0 %v284
    %v683 = vpop.f32.mrb[0].mxu0
    %v684 = vadd.f32 %v539, %v683
    %v685 = vpop.f32.mrb[0].mxu0
    %v686 = vpop.f32.mrb[0].mxu0
    %v687 = vadd.f32 %v542, %v686
    %v688 = vpop.f32.mrb[0].mxu0
    %689 = vmatprep.mubr.bf16.mxu0 0
    %690 = vmatmul.mubr.bf16.gmra.mrb[0].mxu0 %v285
    %v691 = vpop.f32.mrb[0].mxu0
    %v692 = vadd.f32 %v547, %v691
    %v693 = vpop.f32.mrb[0].mxu0
    %v694 = vpop.f32.mrb[0].mxu0
    %v695 = vadd.f32 %v550, %v694
    %v696 = vpop.f32.mrb[0].mxu0
    %697 = vmatprep.mubr.bf16.mxu0 0
    %698 = vmatmul.mubr.bf16.gmra.mrb[0].mxu0 %v286
    %v699 = vpop.f32.mrb[0].mxu0
    %v700 = vadd.f32 %v555, %v699
    %v701 = vpop.f32.mrb[0].mxu0
    %v702 = vpop.f32.mrb[0].mxu0
    %v703 = vadd.f32 %v558, %v702
    %v704 = vpop.f32.mrb[0].mxu0
    %705 = vmatprep.mubr.bf16.mxu0 0
    %706 = vmatmul.mubr.bf16.gmra.mrb[0].mxu0 %v287
    %v707 = vpop.f32.mrb[0].mxu0
    %v708 = vadd.f32 %v563, %v707
    %v709 = vpop.f32.mrb[0].mxu0
    %v710 = vpop.f32.mrb[0].mxu0
    %v711 = vadd.f32 %v566, %v710
    %v712 = vpop.f32.mrb[0].mxu0
    %713 = vmatprep.mubr.bf16.mxu0 0
    %714 = vmatmul.mubr.bf16.gmra.mrb[0].mxu0 %v288
    %v715 = vpop.f32.mrb[0].mxu0
    %v716 = vadd.f32 %v571, %v715
    %v717 = vpop.f32.mrb[0].mxu0
    %v718 = vpop.f32.mrb[0].mxu0
    %v719 = vadd.f32 %v574, %v718
    %v720 = vpop.f32.mrb[0].mxu0
    %721 = vmatprep.mubr.bf16.mxu0 0
    %722 = vmatmul.mubr.bf16.gmra.mrb[0].mxu0 %v289
    %v723 = vpop.f32.mrb[0].mxu0
    %v724 = vadd.f32 %v579, %v723
    %v725 = vpop.f32.mrb[0].mxu0
    %v726 = vpop.f32.mrb[0].mxu0
    %v727 = vadd.f32 %v582, %v726
    %v728 = vpop.f32.mrb[0].mxu0
    %729 = vdwg.mxu0
    %v738 = vrot.slane %v282, 6
    %v739 = vrot.slane %v283, 6
    %v740 = vrot.slane %v284, 6
    %v741 = vrot.slane %v285, 6
    %v742 = vrot.slane %v286, 6
    %v743 = vrot.slane %v287, 6
    %v744 = vrot.slane %v288, 6
    %v745 = vrot.slane %v289, 6
    %vm746 = vcmask 1041408
    %v749 = vsel %vm746, 0, %v738
    %v752 = vsel %vm746, 0, %v739
    %v755 = vsel %vm746, 0, %v740
    %v758 = vsel %vm746, 0, %v741
    %v761 = vsel %vm746, 0, %v742
    %v764 = vsel %vm746, 0, %v743
    %v767 = vsel %vm746, 0, %v744
    %v770 = vsel %vm746, 0, %v745
    %s772 = scalar_lea.vmem %s3, 128
    %v773 = vld [vmem:[%s772] sm:$0xf]
    %v774 = vld [vmem:[%s772 + $0x4] sm:$0xf]
    %v775 = vld [vmem:[%s772 + $0x8] sm:$0xf]
    %v776 = vld [vmem:[%s772 + $0xc] sm:$0xf]
    %v777 = vld [vmem:[%s772 + $0x10] sm:$0xf]
    %v778 = vld [vmem:[%s772 + $0x14] sm:$0xf]
    %v779 = vld [vmem:[%s772 + $0x18] sm:$0xf]
    %v780 = vld [vmem:[%s772 + $0x1c] sm:$0xf]
    %v781 = vld [vmem:[%s772 + $0x20] sm:$0xf]
    %v782 = vld [vmem:[%s772 + $0x24] sm:$0xf]
    %v783 = vld [vmem:[%s772 + $0x28] sm:$0xf]
    %v784 = vld [vmem:[%s772 + $0x2c] sm:$0xf]
    %v785 = vld [vmem:[%s772 + $0x30] sm:$0xf]
    %v786 = vld [vmem:[%s772 + $0x34] sm:$0xf]
    %v787 = vld [vmem:[%s772 + $0x38] sm:$0xf]
    %v788 = vld [vmem:[%s772 + $0x3c] sm:$0xf]
    %v805 = vunpack.c.l.b16 %v773
    %v806 = vunpack.c.l.b16 %v774
    %v807 = vunpack.c.l.b16 %v775
    %v808 = vunpack.c.l.b16 %v776
    %v809 = vunpack.c.l.b16 %v777
    %v810 = vunpack.c.l.b16 %v778
    %v811 = vunpack.c.l.b16 %v779
    %v812 = vunpack.c.l.b16 %v780
    %v813 = vunpack.c.l.b16 %v781
    %v814 = vunpack.c.l.b16 %v782
    %v815 = vunpack.c.l.b16 %v783
    %v816 = vunpack.c.l.b16 %v784
    %v817 = vunpack.c.l.b16 %v785
    %v818 = vunpack.c.l.b16 %v786
    %v819 = vunpack.c.l.b16 %v787
    %v820 = vunpack.c.l.b16 %v788
    %v821 = vpack.c.b16 %v806, %v805
    %v822 = vpack.c.b16 %v808, %v807
    %v823 = vpack.c.b16 %v810, %v809
    %v824 = vpack.c.b16 %v812, %v811
    %v825 = vpack.c.b16 %v814, %v813
    %v826 = vpack.c.b16 %v816, %v815
    %v827 = vpack.c.b16 %v818, %v817
    %v828 = vpack.c.b16 %v820, %v819
    %837 = vmatprep.subr.bf16.mxu0 0
    %838 = vmatpush1.bf16.msra.mxu0 %v821
    %839 = vmatprep.subr.bf16.mxu0 0
    %840 = vmatpush1.bf16.msra.mxu0 %v822
    %841 = vmatprep.subr.bf16.mxu0 0
    %842 = vmatpush1.bf16.msra.mxu0 %v823
    %843 = vmatprep.subr.bf16.mxu0 0
    %844 = vmatpush1.bf16.msra.mxu0 %v824
    %845 = vmatprep.subr.bf16.mxu0 0
    %846 = vmatpush1.bf16.msra.mxu0 %v825
    %847 = vmatprep.subr.bf16.mxu0 0
    %848 = vmatpush1.bf16.msra.mxu0 %v826
    %849 = vmatprep.subr.bf16.mxu0 0
    %850 = vmatpush1.bf16.msra.mxu0 %v827
    %851 = vmatprep.subr.bf16.mxu0 0
    %852 = vmatpush1.bf16.msra.mxu0 %v828
    %853 = vmatprep.subr.bf16.mxu0 0
    %854 = vmatpush1.bf16.msra.mxu0 0
    %855 = vmatprep.subr.bf16.mxu0 0
    %856 = vmatpush1.bf16.msra.mxu0 0
    %857 = vmatprep.subr.bf16.mxu0 0
    %858 = vmatpush1.bf16.msra.mxu0 0
    %859 = vmatprep.subr.bf16.mxu0 0
    %860 = vmatpush1.bf16.msra.mxu0 0
    %861 = vmatprep.subr.bf16.mxu0 0
    %862 = vmatpush1.bf16.msra.mxu0 0
    %863 = vmatprep.subr.bf16.mxu0 0
    %864 = vmatpush1.bf16.msra.mxu0 0
    %865 = vmatprep.subr.bf16.mxu0 0
    %866 = vmatpush1.bf16.msra.mxu0 0
    %867 = vmatprep.subr.bf16.mxu0 0
    %868 = vmatpush1.bf16.msra.mxu0 0
    %869 = vmatprep.mubr.bf16.mxu0 0
    %870 = vmatmul.mubr.bf16.gmra.mrb[0].mxu0 %v749
    %v871 = vpop.f32.mrb[0].mxu0
    %v872 = vadd.f32 0.0, %v871
    %v873 = vpop.f32.mrb[0].mxu0
    %v874 = vpop.f32.mrb[0].mxu0
    %v875 = vadd.f32 0.0, %v874
    %v876 = vpop.f32.mrb[0].mxu0
    %877 = vmatprep.mubr.bf16.mxu0 0
    %878 = vmatmul.mubr.bf16.gmra.mrb[0].mxu0 %v752
    %v879 = vpop.f32.mrb[0].mxu0
    %v880 = vadd.f32 0.0, %v879
    %v881 = vpop.f32.mrb[0].mxu0
    %v882 = vpop.f32.mrb[0].mxu0
    %v883 = vadd.f32 0.0, %v882
    %v884 = vpop.f32.mrb[0].mxu0
    %885 = vmatprep.mubr.bf16.mxu0 0
    %886 = vmatmul.mubr.bf16.gmra.mrb[0].mxu0 %v755
    %v887 = vpop.f32.mrb[0].mxu0
    %v888 = vadd.f32 0.0, %v887
    %v889 = vpop.f32.mrb[0].mxu0
    %v890 = vpop.f32.mrb[0].mxu0
    %v891 = vadd.f32 0.0, %v890
    %v892 = vpop.f32.mrb[0].mxu0
    %893 = vmatprep.mubr.bf16.mxu0 0
    %894 = vmatmul.mubr.bf16.gmra.mrb[0].mxu0 %v758
    %v895 = vpop.f32.mrb[0].mxu0
    %v896 = vadd.f32 0.0, %v895
    %v897 = vpop.f32.mrb[0].mxu0
    %v898 = vpop.f32.mrb[0].mxu0
    %v899 = vadd.f32 0.0, %v898
    %v900 = vpop.f32.mrb[0].mxu0
    %901 = vmatprep.mubr.bf16.mxu0 0
    %902 = vmatmul.mubr.bf16.gmra.mrb[0].mxu0 %v761
    %v903 = vpop.f32.mrb[0].mxu0
    %v904 = vadd.f32 0.0, %v903
    %v905 = vpop.f32.mrb[0].mxu0
    %v906 = vpop.f32.mrb[0].mxu0
    %v907 = vadd.f32 0.0, %v906
    %v908 = vpop.f32.mrb[0].mxu0
    %909 = vmatprep.mubr.bf16.mxu0 0
    %910 = vmatmul.mubr.bf16.gmra.mrb[0].mxu0 %v764
    %v911 = vpop.f32.mrb[0].mxu0
    %v912 = vadd.f32 0.0, %v911
    %v913 = vpop.f32.mrb[0].mxu0
    %v914 = vpop.f32.mrb[0].mxu0
    %v915 = vadd.f32 0.0, %v914
    %v916 = vpop.f32.mrb[0].mxu0
    %917 = vmatprep.mubr.bf16.mxu0 0
    %918 = vmatmul.mubr.bf16.gmra.mrb[0].mxu0 %v767
    %v919 = vpop.f32.mrb[0].mxu0
    %v920 = vadd.f32 0.0, %v919
    %v921 = vpop.f32.mrb[0].mxu0
    %v922 = vpop.f32.mrb[0].mxu0
    %v923 = vadd.f32 0.0, %v922
    %v924 = vpop.f32.mrb[0].mxu0
    %925 = vmatprep.mubr.bf16.mxu0 0
    %926 = vmatmul.mubr.bf16.gmra.mrb[0].mxu0 %v770
    %v927 = vpop.f32.mrb[0].mxu0
    %v928 = vadd.f32 0.0, %v927
    %v929 = vpop.f32.mrb[0].mxu0
    %v930 = vpop.f32.mrb[0].mxu0
    %v931 = vadd.f32 0.0, %v930
    %v932 = vpop.f32.mrb[0].mxu0
    %933 = vdwg.mxu0
    %v934 = vadd.f32 %v668, %v872
    %v935 = vadd.f32 %v671, %v875
    %v936 = vadd.f32 %v676, %v880
    %v937 = vadd.f32 %v679, %v883
    %v938 = vadd.f32 %v684, %v888
    %v939 = vadd.f32 %v687, %v891
    %v940 = vadd.f32 %v692, %v896
    %v941 = vadd.f32 %v695, %v899
    %v942 = vadd.f32 %v700, %v904
    %v943 = vadd.f32 %v703, %v907
    %v944 = vadd.f32 %v708, %v912
    %v945 = vadd.f32 %v711, %v915
    %v946 = vadd.f32 %v716, %v920
    %v947 = vadd.f32 %v719, %v923
    %v948 = vadd.f32 %v724, %v928
    %v949 = vadd.f32 %v727, %v931
    %v950 = vrot.slane %v349, 5
    %v951 = vrot.slane %v352, 6
    %v952 = vor.u32 %v950, %v951
    %v953 = vrot.slane %v356, 5
    %v954 = vrot.slane %v359, 6
    %v955 = vor.u32 %v953, %v954
    %v956 = vrot.slane %v363, 5
    %v957 = vrot.slane %v366, 6
    %v958 = vor.u32 %v956, %v957
    %v959 = vrot.slane %v370, 5
    %v960 = vrot.slane %v373, 6
    %v961 = vor.u32 %v959, %v960
    %v962 = vrot.slane %v377, 5
    %v963 = vrot.slane %v380, 6
    %v964 = vor.u32 %v962, %v963
    %v965 = vrot.slane %v384, 5
    %v966 = vrot.slane %v387, 6
    %v967 = vor.u32 %v965, %v966
    %v968 = vrot.slane %v391, 5
    %v969 = vrot.slane %v394, 6
    %v970 = vor.u32 %v968, %v969
    %v971 = vrot.slane %v398, 5
    %v972 = vrot.slane %v401, 6
    %v973 = vor.u32 %v971, %v972
    %vm982 = vcmask 1042432
    %vm983 = vsmask.f32 2304
    %vm984 = vmand %vm982, %vm983
    %v985 = vsel %vm984, 0, %v952
    %v986 = vsel %vm984, 0, %v955
    %v987 = vsel %vm984, 0, %v958
    %v988 = vsel %vm984, 0, %v961
    %v989 = vsel %vm984, 0, %v964
    %v990 = vsel %vm984, 0, %v967
    %v991 = vsel %vm984, 0, %v970
    %v992 = vsel %vm984, 0, %v973
    %s993 = scalar_lea.vmem %s3, 192
    %v994 = vld [vmem:[%s993] sm:$0xf]
    %v995 = vld [vmem:[%s993 + $0x4] sm:$0xf]
    %v996 = vld [vmem:[%s993 + $0x8] sm:$0xf]
    %v997 = vld [vmem:[%s993 + $0xc] sm:$0xf]
    %v998 = vld [vmem:[%s993 + $0x10] sm:$0xf]
    %v999 = vld [vmem:[%s993 + $0x14] sm:$0xf]
    %v1000 = vld [vmem:[%s993 + $0x18] sm:$0xf]
    %v1001 = vld [vmem:[%s993 + $0x1c] sm:$0xf]
    %v1002 = vld [vmem:[%s993 + $0x20] sm:$0xf]
    %v1003 = vld [vmem:[%s993 + $0x24] sm:$0xf]
    %v1004 = vld [vmem:[%s993 + $0x28] sm:$0xf]
    %v1005 = vld [vmem:[%s993 + $0x2c] sm:$0xf]
    %v1006 = vld [vmem:[%s993 + $0x30] sm:$0xf]
    %v1007 = vld [vmem:[%s993 + $0x34] sm:$0xf]
    %v1008 = vld [vmem:[%s993 + $0x38] sm:$0xf]
    %v1009 = vld [vmem:[%s993 + $0x3c] sm:$0xf]
    %v1026 = vunpack.c.l.b16 %v994
    %v1027 = vunpack.c.l.b16 %v995
    %v1028 = vunpack.c.l.b16 %v996
    %v1029 = vunpack.c.l.b16 %v997
    %v1030 = vunpack.c.l.b16 %v998
    %v1031 = vunpack.c.l.b16 %v999
    %v1032 = vunpack.c.l.b16 %v1000
    %v1033 = vunpack.c.l.b16 %v1001
    %v1034 = vunpack.c.l.b16 %v1002
    %v1035 = vunpack.c.l.b16 %v1003
    %v1036 = vunpack.c.l.b16 %v1004
    %v1037 = vunpack.c.l.b16 %v1005
    %v1038 = vunpack.c.l.b16 %v1006
    %v1039 = vunpack.c.l.b16 %v1007
    %v1040 = vunpack.c.l.b16 %v1008
    %v1041 = vunpack.c.l.b16 %v1009
    %v1042 = vpack.c.b16 %v1027, %v1026
    %v1043 = vpack.c.b16 %v1029, %v1028
    %v1044 = vpack.c.b16 %v1031, %v1030
    %v1045 = vpack.c.b16 %v1033, %v1032
    %v1046 = vpack.c.b16 %v1035, %v1034
    %v1047 = vpack.c.b16 %v1037, %v1036
    %v1048 = vpack.c.b16 %v1039, %v1038
    %v1049 = vpack.c.b16 %v1041, %v1040
    %1058 = vmatprep.subr.bf16.mxu0 0
    %1059 = vmatpush1.bf16.msra.mxu0 %v1042
    %1060 = vmatprep.subr.bf16.mxu0 0
    %1061 = vmatpush1.bf16.msra.mxu0 %v1043
    %1062 = vmatprep.subr.bf16.mxu0 0
    %1063 = vmatpush1.bf16.msra.mxu0 %v1044
    %1064 = vmatprep.subr.bf16.mxu0 0
    %1065 = vmatpush1.bf16.msra.mxu0 %v1045
    %1066 = vmatprep.subr.bf16.mxu0 0
    %1067 = vmatpush1.bf16.msra.mxu0 %v1046
    %1068 = vmatprep.subr.bf16.mxu0 0
    %1069 = vmatpush1.bf16.msra.mxu0 %v1047
    %1070 = vmatprep.subr.bf16.mxu0 0
    %1071 = vmatpush1.bf16.msra.mxu0 %v1048
    %1072 = vmatprep.subr.bf16.mxu0 0
    %1073 = vmatpush1.bf16.msra.mxu0 %v1049
    %1074 = vmatprep.subr.bf16.mxu0 0
    %1075 = vmatpush1.bf16.msra.mxu0 0
    %1076 = vmatprep.subr.bf16.mxu0 0
    %1077 = vmatpush1.bf16.msra.mxu0 0
    %1078 = vmatprep.subr.bf16.mxu0 0
    %1079 = vmatpush1.bf16.msra.mxu0 0
    %1080 = vmatprep.subr.bf16.mxu0 0
    %1081 = vmatpush1.bf16.msra.mxu0 0
    %1082 = vmatprep.subr.bf16.mxu0 0
    %1083 = vmatpush1.bf16.msra.mxu0 0
    %1084 = vmatprep.subr.bf16.mxu0 0
    %1085 = vmatpush1.bf16.msra.mxu0 0
    %1086 = vmatprep.subr.bf16.mxu0 0
    %1087 = vmatpush1.bf16.msra.mxu0 0
    %1088 = vmatprep.subr.bf16.mxu0 0
    %1089 = vmatpush1.bf16.msra.mxu0 0
    %1090 = vmatprep.mubr.bf16.mxu0 0
    %1091 = vmatmul.mubr.bf16.gmra.mrb[0].mxu0 %v985
    %v1092 = vpop.f32.mrb[0].mxu0
    %v1093 = vadd.f32 0.0, %v1092
    %v1094 = vpop.f32.mrb[0].mxu0
    %v1095 = vpop.f32.mrb[0].mxu0
    %v1096 = vadd.f32 0.0, %v1095
    %v1097 = vpop.f32.mrb[0].mxu0
    %1098 = vmatprep.mubr.bf16.mxu0 0
    %1099 = vmatmul.mubr.bf16.gmra.mrb[0].mxu0 %v986
    %v1100 = vpop.f32.mrb[0].mxu0
    %v1101 = vadd.f32 0.0, %v1100
    %v1102 = vpop.f32.mrb[0].mxu0
    %v1103 = vpop.f32.mrb[0].mxu0
    %v1104 = vadd.f32 0.0, %v1103
    %v1105 = vpop.f32.mrb[0].mxu0
    %1106 = vmatprep.mubr.bf16.mxu0 0
    %1107 = vmatmul.mubr.bf16.gmra.mrb[0].mxu0 %v987
    %v1108 = vpop.f32.mrb[0].mxu0
    %v1109 = vadd.f32 0.0, %v1108
    %v1110 = vpop.f32.mrb[0].mxu0
    %v1111 = vpop.f32.mrb[0].mxu0
    %v1112 = vadd.f32 0.0, %v1111
    %v1113 = vpop.f32.mrb[0].mxu0
    %1114 = vmatprep.mubr.bf16.mxu0 0
    %1115 = vmatmul.mubr.bf16.gmra.mrb[0].mxu0 %v988
    %v1116 = vpop.f32.mrb[0].mxu0
    %v1117 = vadd.f32 0.0, %v1116
    %v1118 = vpop.f32.mrb[0].mxu0
    %v1119 = vpop.f32.mrb[0].mxu0
    %v1120 = vadd.f32 0.0, %v1119
    %v1121 = vpop.f32.mrb[0].mxu0
    %1122 = vmatprep.mubr.bf16.mxu0 0
    %1123 = vmatmul.mubr.bf16.gmra.mrb[0].mxu0 %v989
    %v1124 = vpop.f32.mrb[0].mxu0
    %v1125 = vadd.f32 0.0, %v1124
    %v1126 = vpop.f32.mrb[0].mxu0
    %v1127 = vpop.f32.mrb[0].mxu0
    %v1128 = vadd.f32 0.0, %v1127
    %v1129 = vpop.f32.mrb[0].mxu0
    %1130 = vmatprep.mubr.bf16.mxu0 0
    %1131 = vmatmul.mubr.bf16.gmra.mrb[0].mxu0 %v990
    %v1132 = vpop.f32.mrb[0].mxu0
    %v1133 = vadd.f32 0.0, %v1132
    %v1134 = vpop.f32.mrb[0].mxu0
    %v1135 = vpop.f32.mrb[0].mxu0
    %v1136 = vadd.f32 0.0, %v1135
    %v1137 = vpop.f32.mrb[0].mxu0
    %1138 = vmatprep.mubr.bf16.mxu0 0
    %1139 = vmatmul.mubr.bf16.gmra.mrb[0].mxu0 %v991
    %v1140 = vpop.f32.mrb[0].mxu0
    %v1141 = vadd.f32 0.0, %v1140
    %v1142 = vpop.f32.mrb[0].mxu0
    %v1143 = vpop.f32.mrb[0].mxu0
    %v1144 = vadd.f32 0.0, %v1143
    %v1145 = vpop.f32.mrb[0].mxu0
    %1146 = vmatprep.mubr.bf16.mxu0 0
    %1147 = vmatmul.mubr.bf16.gmra.mrb[0].mxu0 %v992
    %v1148 = vpop.f32.mrb[0].mxu0
    %v1149 = vadd.f32 0.0, %v1148
    %v1150 = vpop.f32.mrb[0].mxu0
    %v1151 = vpop.f32.mrb[0].mxu0
    %v1152 = vadd.f32 0.0, %v1151
    %v1153 = vpop.f32.mrb[0].mxu0
    %1154 = vdwg.mxu0
    %v1155 = vadd.f32 %v934, %v1093
    %v1156 = vadd.f32 %v935, %v1096
    %v1157 = vadd.f32 %v936, %v1101
    %v1158 = vadd.f32 %v937, %v1104
    %v1159 = vadd.f32 %v938, %v1109
    %v1160 = vadd.f32 %v939, %v1112
    %v1161 = vadd.f32 %v940, %v1117
    %v1162 = vadd.f32 %v941, %v1120
    %v1163 = vadd.f32 %v942, %v1125
    %v1164 = vadd.f32 %v943, %v1128
    %v1165 = vadd.f32 %v944, %v1133
    %v1166 = vadd.f32 %v945, %v1136
    %v1167 = vadd.f32 %v946, %v1141
    %v1168 = vadd.f32 %v947, %v1144
    %v1169 = vadd.f32 %v948, %v1149
    %v1170 = vadd.f32 %v949, %v1152
    %v1171 = vld [vmem:[%s4] sm:$0x1]
    %v1173 = vlaneseq
    %v1174 = vshrl.u32 %v1173, 7
    %v1175 = vsub.s32 0, %v1174
    %v1176 = vrot.slane %v1171, %v1175
    %v1178 = vadd.f32 %v1155, %v1176
    %v1179 = vadd.f32 %v1156, %v1176
    %v1180 = vadd.f32 %v1157, %v1176
    %v1181 = vadd.f32 %v1158, %v1176
    %v1182 = vadd.f32 %v1159, %v1176
    %v1183 = vadd.f32 %v1160, %v1176
    %v1184 = vadd.f32 %v1161, %v1176
    %v1185 = vadd.f32 %v1162, %v1176
    %v1186 = vadd.f32 %v1163, %v1176
    %v1187 = vadd.f32 %v1164, %v1176
    %v1188 = vadd.f32 %v1165, %v1176
    %v1189 = vadd.f32 %v1166, %v1176
    %v1190 = vadd.f32 %v1167, %v1176
    %v1191 = vadd.f32 %v1168, %v1176
    %v1192 = vadd.f32 %v1169, %v1176
    %v1193 = vadd.f32 %v1170, %v1176
    %v1194 = vmax.f32 %v1178, 0.0
    %v1195 = vmax.f32 %v1179, 0.0
    %v1196 = vmax.f32 %v1180, 0.0
    %v1197 = vmax.f32 %v1181, 0.0
    %v1198 = vmax.f32 %v1182, 0.0
    %v1199 = vmax.f32 %v1183, 0.0
    %v1200 = vmax.f32 %v1184, 0.0
    %v1201 = vmax.f32 %v1185, 0.0
    %v1202 = vmax.f32 %v1186, 0.0
    %v1203 = vmax.f32 %v1187, 0.0
    %v1204 = vmax.f32 %v1188, 0.0
    %v1205 = vmax.f32 %v1189, 0.0
    %v1206 = vmax.f32 %v1190, 0.0
    %v1207 = vmax.f32 %v1191, 0.0
    %v1208 = vmax.f32 %v1192, 0.0
    %v1209 = vmax.f32 %v1193, 0.0
    %vm1210 = vcmask 523264
    %v1211 = vsel %vm1210, %v1194, 0.0
    %v1212 = vsel %vm1210, %v1195, 0.0
    %v1213 = vadd.f32 %v1211, %v1212
    %v1214 = vrot.slane %v1213, 4
    %v1215 = vadd.f32 %v1213, %v1214
    %v1216 = vrot.slane %v1215, 2
    %v1217 = vadd.f32 %v1215, %v1216
    %v1218 = vrot.slane %v1217, 1
    %v1219 = vadd.f32 %v1217, %v1218
    %v1220 = vsel %vm1210, %v1196, 0.0
    %v1221 = vsel %vm1210, %v1197, 0.0
    %v1222 = vadd.f32 %v1220, %v1221
    %v1223 = vrot.slane %v1222, 4
    %v1224 = vadd.f32 %v1222, %v1223
    %v1225 = vrot.slane %v1224, 2
    %v1226 = vadd.f32 %v1224, %v1225
    %v1227 = vrot.slane %v1226, 1
    %v1228 = vadd.f32 %v1226, %v1227
    %v1229 = vsel %vm1210, %v1198, 0.0
    %v1230 = vsel %vm1210, %v1199, 0.0
    %v1231 = vadd.f32 %v1229, %v1230
    %v1232 = vrot.slane %v1231, 4
    %v1233 = vadd.f32 %v1231, %v1232
    %v1234 = vrot.slane %v1233, 2
    %v1235 = vadd.f32 %v1233, %v1234
    %v1236 = vrot.slane %v1235, 1
    %v1237 = vadd.f32 %v1235, %v1236
    %v1238 = vsel %vm1210, %v1200, 0.0
    %v1239 = vsel %vm1210, %v1201, 0.0
    %v1240 = vadd.f32 %v1238, %v1239
    %v1241 = vrot.slane %v1240, 4
    %v1242 = vadd.f32 %v1240, %v1241
    %v1243 = vrot.slane %v1242, 2
    %v1244 = vadd.f32 %v1242, %v1243
    %v1245 = vrot.slane %v1244, 1
    %v1246 = vadd.f32 %v1244, %v1245
    %v1247 = vsel %vm1210, %v1202, 0.0
    %v1248 = vsel %vm1210, %v1203, 0.0
    %v1249 = vadd.f32 %v1247, %v1248
    %v1250 = vrot.slane %v1249, 4
    %v1251 = vadd.f32 %v1249, %v1250
    %v1252 = vrot.slane %v1251, 2
    %v1253 = vadd.f32 %v1251, %v1252
    %v1254 = vrot.slane %v1253, 1
    %v1255 = vadd.f32 %v1253, %v1254
    %v1256 = vsel %vm1210, %v1204, 0.0
    %v1257 = vsel %vm1210, %v1205, 0.0
    %v1258 = vadd.f32 %v1256, %v1257
    %v1259 = vrot.slane %v1258, 4
    %v1260 = vadd.f32 %v1258, %v1259
    %v1261 = vrot.slane %v1260, 2
    %v1262 = vadd.f32 %v1260, %v1261
    %v1263 = vrot.slane %v1262, 1
    %v1264 = vadd.f32 %v1262, %v1263
    %v1265 = vsel %vm1210, %v1206, 0.0
    %v1266 = vsel %vm1210, %v1207, 0.0
    %v1267 = vadd.f32 %v1265, %v1266
    %v1268 = vrot.slane %v1267, 4
    %v1269 = vadd.f32 %v1267, %v1268
    %v1270 = vrot.slane %v1269, 2
    %v1271 = vadd.f32 %v1269, %v1270
    %v1272 = vrot.slane %v1271, 1
    %v1273 = vadd.f32 %v1271, %v1272
    %v1274 = vsel %vm1210, %v1208, 0.0
    %v1275 = vsel %vm1210, %v1209, 0.0
    %v1276 = vadd.f32 %v1274, %v1275
    %v1277 = vrot.slane %v1276, 4
    %v1278 = vadd.f32 %v1276, %v1277
    %v1279 = vrot.slane %v1278, 2
    %v1280 = vadd.f32 %v1278, %v1279
    %v1281 = vrot.slane %v1280, 1
    %v1282 = vadd.f32 %v1280, %v1281
    %v1283 = vrcp.pop 16.0
    %v1284 = vmul.f32 %v1219, %v1283
    %v1285 = vmul.f32 %v1228, %v1283
    %v1286 = vmul.f32 %v1237, %v1283
    %v1287 = vmul.f32 %v1246, %v1283
    %v1288 = vmul.f32 %v1255, %v1283
    %v1289 = vmul.f32 %v1264, %v1283
    %v1290 = vmul.f32 %v1273, %v1283
    %v1291 = vmul.f32 %v1282, %v1283
    %vm1300 = vcmask 1041409
    %v1301 = vsel %vm1300, %v1285, %v1284
    %vm1302 = vcmask 1042434
    %v1303 = vsel %vm1302, %v1286, %v1301
    %vm1304 = vcmask 1043459
    %v1305 = vsel %vm1304, %v1287, %v1303
    %vm1306 = vcmask 1044484
    %v1307 = vsel %vm1306, %v1288, %v1305
    %vm1308 = vcmask 1045509
    %v1309 = vsel %vm1308, %v1289, %v1307
    %vm1310 = vcmask 1046534
    %v1311 = vsel %vm1310, %v1290, %v1309
    %vm1312 = vcmask 1047559
    %v1313 = vsel %vm1312, %v1291, %v1311
    %1315 = vst.msk [vmem:[#allocation2] sm:$0xff] %vm1210, %v1313
    // Predicated region
    $region22: #{_forward_impl.1} parent=1 // pred_check
      _
    $region23: #{_forward_impl.1} parent=1 // pred_check_branch
      %1317 = sbr.rel (0) target = $region25
    $region24: #{_forward_impl.1} parent=1 // pred_region
      %s1319 = ssub.s32 128, 128
      %1320 = vsyncadd [#allocation3], %s1319
      %s1322 = sshll.u32 [#allocation2], 4
      %s1323 = int_to_ptr.vmem [resolvable:$true] %s1322
      %1325 = dma.vmem_to_hbm [thread:$0]  %s1323, 128, %s5, [#allocation3]
    $region25: #{_forward_impl.1} parent=1 // pred_fallthru
      _
    // Predicated region
    $region26: #{_forward_impl.1} parent=1 // pred_check
      _
    $region27: #{_forward_impl.1} parent=1 // pred_check_branch
      %1327 = sbr.rel (0) target = $region29
    $region28: #{_forward_impl.1} parent=1 // pred_region
      %1328 = dma.done [#allocation3], 128
    $region29: #{_forward_impl.1} parent=1 // pred_fallthru
      _
    %1329 = vsyncpa [#allocation3], 1

</llo_original>
